<compile_context>
chip_gen: v5e
topology: v5e:2x2
jax: 0.10.0
libtpu: 0.0.40
codegen_flags: <defaults>
</compile_context>

<pallas_src>
import jax
import jax.numpy as jnp
from jax.experimental import pallas as pl
from jax.experimental.pallas import tpu as pltpu


LANE = 128


def _round_up(x: int, m: int) -> int:
    return (x + m - 1) // m * m


def _mlp_kernel(x_ref, w1_ref, b1_ref, w2_ref, b2_ref, w3_ref, b3_ref,
                w4_ref, b4_ref, o_ref):
    """Whole forward pass for one batch tile: 4 bf16 matmuls (f32 acc) + 3 ReLUs."""
    x = x_ref[...].astype(jnp.bfloat16)

    h = jnp.dot(x, w1_ref[...], preferred_element_type=jnp.float32) + b1_ref[...]
    h = jnp.maximum(h, 0.0).astype(jnp.bfloat16)

    h = jnp.dot(h, w2_ref[...], preferred_element_type=jnp.float32) + b2_ref[...]
    h = jnp.maximum(h, 0.0).astype(jnp.bfloat16)

    h = jnp.dot(h, w3_ref[...], preferred_element_type=jnp.float32) + b3_ref[...]
    h = jnp.maximum(h, 0.0).astype(jnp.bfloat16)

    out = jnp.dot(h, w4_ref[...], preferred_element_type=jnp.float32) + b4_ref[...]
    o_ref[...] = out.astype(o_ref.dtype)


def base_neural_function_forward(states, params, *, batch_tile=1024):
    """states: (B, state_dim) float32. params: dict of weights/biases.

    Weights are stored transposed vs. PyTorch as (in_dim, out_dim) so the
    kernel computes y = x @ W + b directly on the MXU. Biases are (1, out_dim).
    """
    B, state_dim = states.shape
    w1, b1 = params["w1"], params["b1"]
    w2, b2 = params["w2"], params["b2"]
    w3, b3 = params["w3"], params["b3"]
    w4, b4 = params["w4"], params["b4"]
    hidden = w1.shape[1]
    action_n = w4.shape[1]

    # ---- batch tile: large (amortize per-step overhead / fill MXU M dim), ----
    # ---- but keep >= 2 grid steps when possible so both v7x TCs get work. ----
    tile = int(batch_tile)
    if B >= 16 * tile:
        tile = max(tile, 2048)          # very large batches: go even bigger
    tile = _round_up(max(tile, LANE), LANE)
    two_way = _round_up(pl.cdiv(B, 2), LANE)
    tile = max(LANE, min(tile, two_way))
    grid = (pl.cdiv(B, tile),)
    # NOTE: no wrapper-side jnp.pad of the batch — the partial last block's
    # store is masked by Pallas and there are no cross-row reductions.

    # ---- lane-dense output: pad final layer to a multiple of 128 lanes ------
    out_pad = _round_up(max(action_n, LANE), LANE)
    w4p = jnp.pad(w4, ((0, 0), (0, out_pad - action_n)))
    b4p = jnp.pad(b4, ((0, 0), (0, out_pad - action_n)))

    # ---- bf16 matmul operands, f32 biases -----------------------------------
    w1c, w2c, w3c, w4c = (w.astype(jnp.bfloat16) for w in (w1, w2, w3, w4p))
    b1c, b2c, b3c, b4c = (b.astype(jnp.float32) for b in (b1, b2, b3, b4p))
    consts = (w1c, b1c, w2c, b2c, w3c, b3c, w4c, b4c)
    weight_bytes = sum(int(a.size) * a.dtype.itemsize for a in consts)

    # ---- cost estimate (helps XLA schedule around the custom call) ----------
    flops = 2 * B * (state_dim * hidden + 2 * hidden * hidden + hidden * out_pad)
    bytes_accessed = (B * state_dim * states.dtype.itemsize   # input read
                      + B * out_pad * 2                       # bf16 output write
                      + weight_bytes)                         # weights read once
    cost = pl.CostEstimate(flops=flops, transcendentals=0,
                           bytes_accessed=bytes_accessed)

    # ---- raise scoped-VMEM limit only if a huge tile needs it (v5e: 16 MiB) -
    vmem_need = (2 * tile * state_dim * 4        # double-buffered f32 input blocks
                 + 2 * tile * out_pad * 2        # double-buffered bf16 output blocks
                 + weight_bytes                  # resident weights
                 + 4 * tile * hidden * 4)        # f32 intermediates headroom
    vmem_limit = None
    if vmem_need > 8 * 1024 * 1024:
        vmem_limit = min(_round_up(2 * vmem_need, 1 << 20), 48 * 1024 * 1024)

    def _run(weight_mode):
        def const_spec(shape):
            idx = lambda i, _nd=len(shape): (0,) * _nd
            if weight_mode is None:
                return pl.BlockSpec(shape, idx)
            return pl.BlockSpec(shape, idx, pipeline_mode=weight_mode)

        return pl.pallas_call(
            _mlp_kernel,
            out_shape=jax.ShapeDtypeStruct((B, out_pad), jnp.bfloat16),
            grid_spec=pltpu.PrefetchScalarGridSpec(
                num_scalar_prefetch=0,
                grid=grid,
                in_specs=[
                    pl.BlockSpec((tile, state_dim), lambda i: (i, 0)),
                    const_spec(w1c.shape), const_spec(b1c.shape),
                    const_spec(w2c.shape), const_spec(b2c.shape),
                    const_spec(w3c.shape), const_spec(b3c.shape),
                    const_spec(w4c.shape), const_spec(b4c.shape),
                ],
                out_specs=pl.BlockSpec((tile, out_pad), lambda i: (i, 0)),
            ),
            compiler_params=pltpu.CompilerParams(
                dimension_semantics=("parallel",),
                vmem_limit_bytes=vmem_limit),
            cost_estimate=cost,
        )(states, *consts)

    try:
        # Weights/biases are revisited every step (constant index maps): a
        # single VMEM buffer suffices; drops the dead second buffer + per-step
        # DMA descriptor bookkeeping.
        mode = pl.Buffered(1) if hasattr(pl, "Buffered") else None
        out_padded = _run(mode)
    except Exception:
        out_padded = _run(None)   # fall back to default double-buffering

    # Slice away the lane padding; restore the module's f32 output dtype.
    return out_padded[:, :action_n].astype(states.dtype)


def init_params(key, state_dim, action_n, inner_layer=128):
    """Deterministic init mimicking PyTorch nn.Linear default (U[-1/sqrt(fan_in), +])."""
    dims = [(state_dim, inner_layer),
            (inner_layer, inner_layer),
            (inner_layer, inner_layer),
            (inner_layer, action_n)]
    params = {}
    for idx, (fan_in, fan_out) in enumerate(dims, start=1):
        key, kw, kb = jax.random.split(key, 3)
        bound = 1.0 / jnp.sqrt(jnp.float32(fan_in))
        params[f"w{idx}"] = jax.random.uniform(
            kw, (fan_in, fan_out), jnp.float32, -bound, bound)
        params[f"b{idx}"] = jax.random.uniform(
            kb, (1, fan_out), jnp.float32, -bound, bound)
    return params


def _reference_forward_f32(states, params):
    h = jnp.maximum(states @ params["w1"] + params["b1"], 0.0)
    h = jnp.maximum(h @ params["w2"] + params["b2"], 0.0)
    h = jnp.maximum(h @ params["w3"] + params["b3"], 0.0)
    return h @ params["w4"] + params["b4"]


def _reference_forward_bf16(states, params):
    """Mirrors the kernel's numerics: bf16 matmul operands, f32 accumulation."""
    def layer(x, w, b, relu):
        y = jnp.dot(x.astype(jnp.bfloat16), w.astype(jnp.bfloat16),
                    preferred_element_type=jnp.float32) + b
        return jnp.maximum(y, 0.0) if relu else y
    h = layer(states, params["w1"], params["b1"], True)
    h = layer(h, params["w2"], params["b2"], True)
    h = layer(h, params["w3"], params["b3"], True)
    return layer(h, params["w4"], params["b4"], False)


if __name__ == "__main__":
    state_dim, action_n, inner_layer = 32, 4, 128
    batch = 500  # not a multiple of the tile: exercises the masked partial block

    key = jax.random.PRNGKey(0)
    key, k_states = jax.random.split(key)
    states = jax.random.normal(k_states, (batch, state_dim), jnp.float32)
    params = init_params(key, state_dim, action_n, inner_layer)

    out = base_neural_function_forward(states, params)
    out = jax.block_until_ready(out)
    assert out.shape == (batch, action_n)

    # Tight check against a reference with matching bf16/f32 numerics
    # (kernel output additionally round-trips through bf16 storage).
    ref_bf16 = _reference_forward_bf16(states, params)
    assert jnp.allclose(out, ref_bf16, atol=2e-2, rtol=2e-2)

    # Loose sanity check against the pure-f32 reference (bf16 rounding only).
    ref_f32 = _reference_forward_f32(states, params)
    assert jnp.allclose(out, ref_f32, atol=1e-1, rtol=1e-1)

    print("KERNEL_OK")
</pallas_src>

<mosaic_0001>
module attributes {stable_mosaic.version = 11 : i64} {
  func.func @_mlp_kernel(%arg0: i32, %arg1: memref<256x32xf32, #tpu.memory_space<vmem>>, %arg2: memref<32x128xbf16, #tpu.memory_space<vmem>>, %arg3: memref<1x128xf32, #tpu.memory_space<vmem>>, %arg4: memref<128x128xbf16, #tpu.memory_space<vmem>>, %arg5: memref<1x128xf32, #tpu.memory_space<vmem>>, %arg6: memref<128x128xbf16, #tpu.memory_space<vmem>>, %arg7: memref<1x128xf32, #tpu.memory_space<vmem>>, %arg8: memref<128x128xbf16, #tpu.memory_space<vmem>>, %arg9: memref<1x128xf32, #tpu.memory_space<vmem>>, %arg10: memref<256x128xbf16, #tpu.memory_space<vmem>>) attributes {dimension_semantics = [#tpu.dimension_semantics<parallel>], iteration_bounds = array<i64: 2>, scalar_prefetch = 0 : i64, scratch_operands = 0 : i64, tpu.core_type = #tpu.core_type<tc>, window_params = [{transform_indices = @transform_0, window_bounds = array<i64: 256, 32>}, {pipeline_mode = #tpu.pipeline_mode<synchronous>, transform_indices = @transform_1, window_bounds = array<i64: 32, 128>}, {pipeline_mode = #tpu.pipeline_mode<synchronous>, transform_indices = @transform_2, window_bounds = array<i64: 1, 128>}, {pipeline_mode = #tpu.pipeline_mode<synchronous>, transform_indices = @transform_3, window_bounds = array<i64: 128, 128>}, {pipeline_mode = #tpu.pipeline_mode<synchronous>, transform_indices = @transform_4, window_bounds = array<i64: 1, 128>}, {pipeline_mode = #tpu.pipeline_mode<synchronous>, transform_indices = @transform_5, window_bounds = array<i64: 128, 128>}, {pipeline_mode = #tpu.pipeline_mode<synchronous>, transform_indices = @transform_6, window_bounds = array<i64: 1, 128>}, {pipeline_mode = #tpu.pipeline_mode<synchronous>, transform_indices = @transform_7, window_bounds = array<i64: 128, 128>}, {pipeline_mode = #tpu.pipeline_mode<synchronous>, transform_indices = @transform_8, window_bounds = array<i64: 1, 128>}, {transform_indices = @transform_9, window_bounds = array<i64: 256, 128>}]} {
    %c0 = arith.constant 0 : index
    %c0_0 = arith.constant 0 : index
    %0 = vector.load %arg1[%c0, %c0_0] : memref<256x32xf32, #tpu.memory_space<vmem>>, vector<256x32xf32>
    %1 = arith.truncf %0 : vector<256x32xf32> to vector<256x32xbf16>
    %c0_1 = arith.constant 0 : index
    %c0_2 = arith.constant 0 : index
    %2 = vector.load %arg2[%c0_1, %c0_2] : memref<32x128xbf16, #tpu.memory_space<vmem>>, vector<32x128xbf16>
    %cst = arith.constant dense<0.000000e+00> : vector<256x128xf32>
    %3 = tpu.matmul %1, %2, %cst {dimension_numbers = #tpu.dot_dimension_numbers<[1], [0], [0], [1], [0, 0, 1, 1], [], []>} : vector<256x32xbf16>, vector<32x128xbf16>, vector<256x128xf32> -> vector<256x128xf32>
    %c0_3 = arith.constant 0 : index
    %c0_4 = arith.constant 0 : index
    %4 = vector.load %arg3[%c0_3, %c0_4] : memref<1x128xf32, #tpu.memory_space<vmem>>, vector<1x128xf32>
    %5 = vector.broadcast %4 : vector<1x128xf32> to vector<256x128xf32>
    %6 = arith.addf %3, %5 : vector<256x128xf32>
    %cst_5 = arith.constant 0.000000e+00 : f32
    %7 = vector.broadcast %cst_5 : f32 to vector<256x128xf32>
    %8 = arith.maximumf %6, %7 : vector<256x128xf32>
    %9 = arith.truncf %8 : vector<256x128xf32> to vector<256x128xbf16>
    %c0_6 = arith.constant 0 : index
    %c0_7 = arith.constant 0 : index
    %10 = vector.load %arg4[%c0_6, %c0_7] : memref<128x128xbf16, #tpu.memory_space<vmem>>, vector<128x128xbf16>
    %cst_8 = arith.constant dense<0.000000e+00> : vector<256x128xf32>
    %11 = tpu.matmul %9, %10, %cst_8 {dimension_numbers = #tpu.dot_dimension_numbers<[1], [0], [0], [1], [0, 0, 1, 1], [], []>} : vector<256x128xbf16>, vector<128x128xbf16>, vector<256x128xf32> -> vector<256x128xf32>
    %c0_9 = arith.constant 0 : index
    %c0_10 = arith.constant 0 : index
    %12 = vector.load %arg5[%c0_9, %c0_10] : memref<1x128xf32, #tpu.memory_space<vmem>>, vector<1x128xf32>
    %13 = vector.broadcast %12 : vector<1x128xf32> to vector<256x128xf32>
    %14 = arith.addf %11, %13 : vector<256x128xf32>
    %cst_11 = arith.constant 0.000000e+00 : f32
    %15 = vector.broadcast %cst_11 : f32 to vector<256x128xf32>
    %16 = arith.maximumf %14, %15 : vector<256x128xf32>
    %17 = arith.truncf %16 : vector<256x128xf32> to vector<256x128xbf16>
    %c0_12 = arith.constant 0 : index
    %c0_13 = arith.constant 0 : index
    %18 = vector.load %arg6[%c0_12, %c0_13] : memref<128x128xbf16, #tpu.memory_space<vmem>>, vector<128x128xbf16>
    %cst_14 = arith.constant dense<0.000000e+00> : vector<256x128xf32>
    %19 = tpu.matmul %17, %18, %cst_14 {dimension_numbers = #tpu.dot_dimension_numbers<[1], [0], [0], [1], [0, 0, 1, 1], [], []>} : vector<256x128xbf16>, vector<128x128xbf16>, vector<256x128xf32> -> vector<256x128xf32>
    %c0_15 = arith.constant 0 : index
    %c0_16 = arith.constant 0 : index
    %20 = vector.load %arg7[%c0_15, %c0_16] : memref<1x128xf32, #tpu.memory_space<vmem>>, vector<1x128xf32>
    %21 = vector.broadcast %20 : vector<1x128xf32> to vector<256x128xf32>
    %22 = arith.addf %19, %21 : vector<256x128xf32>
    %cst_17 = arith.constant 0.000000e+00 : f32
    %23 = vector.broadcast %cst_17 : f32 to vector<256x128xf32>
    %24 = arith.maximumf %22, %23 : vector<256x128xf32>
    %25 = arith.truncf %24 : vector<256x128xf32> to vector<256x128xbf16>
    %c0_18 = arith.constant 0 : index
    %c0_19 = arith.constant 0 : index
    %26 = vector.load %arg8[%c0_18, %c0_19] : memref<128x128xbf16, #tpu.memory_space<vmem>>, vector<128x128xbf16>
    %cst_20 = arith.constant dense<0.000000e+00> : vector<256x128xf32>
    %27 = tpu.matmul %25, %26, %cst_20 {dimension_numbers = #tpu.dot_dimension_numbers<[1], [0], [0], [1], [0, 0, 1, 1], [], []>} : vector<256x128xbf16>, vector<128x128xbf16>, vector<256x128xf32> -> vector<256x128xf32>
    %c0_21 = arith.constant 0 : index
    %c0_22 = arith.constant 0 : index
    %28 = vector.load %arg9[%c0_21, %c0_22] : memref<1x128xf32, #tpu.memory_space<vmem>>, vector<1x128xf32>
    %29 = vector.broadcast %28 : vector<1x128xf32> to vector<256x128xf32>
    %30 = arith.addf %27, %29 : vector<256x128xf32>
    %31 = arith.truncf %30 : vector<256x128xf32> to vector<256x128xbf16>
    %c0_23 = arith.constant 0 : index
    %c0_24 = arith.constant 0 : index
    %32 = vector.load %arg10[%c0_23, %c0_24] : memref<256x128xbf16, #tpu.memory_space<vmem>>, vector<256x128xbf16>
    tpu.vector_store %arg10[%c0_23, %c0_24], %31 {strides = array<i32>} : memref<256x128xbf16, #tpu.memory_space<vmem>>, vector<256x128xbf16>,
    return
  }
  func.func @transform_0(%arg0: i32) -> (i32, i32) {
    %c0_i32 = arith.constant 0 : i32
    %c0_i32_0 = arith.constant 0 : i32
    return %arg0, %c0_i32 : i32, i32
  }
  func.func @transform_1(%arg0: i32) -> (i32, i32) {
    %c0_i32 = arith.constant 0 : i32
    %c0_i32_0 = arith.constant 0 : i32
    %c0_i32_1 = arith.constant 0 : i32
    return %c0_i32, %c0_i32_0 : i32, i32
  }
  func.func @transform_2(%arg0: i32) -> (i32, i32) {
    %c0_i32 = arith.constant 0 : i32
    %c0_i32_0 = arith.constant 0 : i32
    %c0_i32_1 = arith.constant 0 : i32
    return %c0_i32, %c0_i32_0 : i32, i32
  }
  func.func @transform_3(%arg0: i32) -> (i32, i32) {
    %c0_i32 = arith.constant 0 : i32
    %c0_i32_0 = arith.constant 0 : i32
    %c0_i32_1 = arith.constant 0 : i32
    return %c0_i32, %c0_i32_0 : i32, i32
  }
  func.func @transform_4(%arg0: i32) -> (i32, i32) {
    %c0_i32 = arith.constant 0 : i32
    %c0_i32_0 = arith.constant 0 : i32
    %c0_i32_1 = arith.constant 0 : i32
    return %c0_i32, %c0_i32_0 : i32, i32
  }
  func.func @transform_5(%arg0: i32) -> (i32, i32) {
    %c0_i32 = arith.constant 0 : i32
    %c0_i32_0 = arith.constant 0 : i32
    %c0_i32_1 = arith.constant 0 : i32
    return %c0_i32, %c0_i32_0 : i32, i32
  }
  func.func @transform_6(%arg0: i32) -> (i32, i32) {
    %c0_i32 = arith.constant 0 : i32
    %c0_i32_0 = arith.constant 0 : i32
    %c0_i32_1 = arith.constant 0 : i32
    return %c0_i32, %c0_i32_0 : i32, i32
  }
  func.func @transform_7(%arg0: i32) -> (i32, i32) {
    %c0_i32 = arith.constant 0 : i32
    %c0_i32_0 = arith.constant 0 : i32
    %c0_i32_1 = arith.constant 0 : i32
    return %c0_i32, %c0_i32_0 : i32, i32
  }
  func.func @transform_8(%arg0: i32) -> (i32, i32) {
    %c0_i32 = arith.constant 0 : i32
    %c0_i32_0 = arith.constant 0 : i32
    %c0_i32_1 = arith.constant 0 : i32
    return %c0_i32, %c0_i32_0 : i32, i32
  }
  func.func @transform_9(%arg0: i32) -> (i32, i32) {
    %c0_i32 = arith.constant 0 : i32
    %c0_i32_0 = arith.constant 0 : i32
    return %arg0, %c0_i32 : i32, i32
  }
}

module attributes {stable_mosaic.version = 11 : i64} {
  func.func @_mlp_kernel(%arg0: i32, %arg1: memref<256x32xf32, #tpu.memory_space<vmem>>, %arg2: memref<32x128xbf16, #tpu.memory_space<vmem>>, %arg3: memref<1x128xf32, #tpu.memory_space<vmem>>, %arg4: memref<128x128xbf16, #tpu.memory_space<vmem>>, %arg5: memref<1x128xf32, #tpu.memory_space<vmem>>, %arg6: memref<128x128xbf16, #tpu.memory_space<vmem>>, %arg7: memref<1x128xf32, #tpu.memory_space<vmem>>, %arg8: memref<128x128xbf16, #tpu.memory_space<vmem>>, %arg9: memref<1x128xf32, #tpu.memory_space<vmem>>, %arg10: memref<256x128xbf16, #tpu.memory_space<vmem>>) attributes {dimension_semantics = [#tpu.dimension_semantics<parallel>], iteration_bounds = array<i64: 2>, scalar_prefetch = 0 : i64, scratch_operands = 0 : i64, tpu.core_type = #tpu.core_type<tc>, window_params = [{transform_indices = @transform_0, window_bounds = array<i64: 256, 32>}, {pipeline_mode = #tpu.pipeline_mode<synchronous>, transform_indices = @transform_1, window_bounds = array<i64: 32, 128>}, {pipeline_mode = #tpu.pipeline_mode<synchronous>, transform_indices = @transform_2, window_bounds = array<i64: 1, 128>}, {pipeline_mode = #tpu.pipeline_mode<synchronous>, transform_indices = @transform_3, window_bounds = array<i64: 128, 128>}, {pipeline_mode = #tpu.pipeline_mode<synchronous>, transform_indices = @transform_4, window_bounds = array<i64: 1, 128>}, {pipeline_mode = #tpu.pipeline_mode<synchronous>, transform_indices = @transform_5, window_bounds = array<i64: 128, 128>}, {pipeline_mode = #tpu.pipeline_mode<synchronous>, transform_indices = @transform_6, window_bounds = array<i64: 1, 128>}, {pipeline_mode = #tpu.pipeline_mode<synchronous>, transform_indices = @transform_7, window_bounds = array<i64: 128, 128>}, {pipeline_mode = #tpu.pipeline_mode<synchronous>, transform_indices = @transform_8, window_bounds = array<i64: 1, 128>}, {transform_indices = @transform_9, window_bounds = array<i64: 256, 128>}]} {
    %c0 = arith.constant 0 : index
    %c0_0 = arith.constant 0 : index
    %0 = vector.load %arg1[%c0, %c0_0] : memref<256x32xf32, #tpu.memory_space<vmem>>, vector<256x32xf32>
    %1 = arith.truncf %0 : vector<256x32xf32> to vector<256x32xbf16>
    %c0_1 = arith.constant 0 : index
    %c0_2 = arith.constant 0 : index
    %2 = vector.load %arg2[%c0_1, %c0_2] : memref<32x128xbf16, #tpu.memory_space<vmem>>, vector<32x128xbf16>
    %cst = arith.constant dense<0.000000e+00> : vector<256x128xf32>
    %3 = tpu.matmul %1, %2, %cst {dimension_numbers = #tpu.dot_dimension_numbers<[1], [0], [0], [1], [0, 0, 1, 1], [], []>} : vector<256x32xbf16>, vector<32x128xbf16>, vector<256x128xf32> -> vector<256x128xf32>
    %c0_3 = arith.constant 0 : index
    %c0_4 = arith.constant 0 : index
    %4 = vector.load %arg3[%c0_3, %c0_4] : memref<1x128xf32, #tpu.memory_space<vmem>>, vector<1x128xf32>
    %5 = vector.broadcast %4 : vector<1x128xf32> to vector<256x128xf32>
    %6 = arith.addf %3, %5 : vector<256x128xf32>
    %cst_5 = arith.constant 0.000000e+00 : f32
    %7 = vector.broadcast %cst_5 : f32 to vector<256x128xf32>
    %8 = arith.maximumf %6, %7 : vector<256x128xf32>
    %9 = arith.truncf %8 : vector<256x128xf32> to vector<256x128xbf16>
    %c0_6 = arith.constant 0 : index
    %c0_7 = arith.constant 0 : index
    %10 = vector.load %arg4[%c0_6, %c0_7] : memref<128x128xbf16, #tpu.memory_space<vmem>>, vector<128x128xbf16>
    %cst_8 = arith.constant dense<0.000000e+00> : vector<256x128xf32>
    %11 = tpu.matmul %9, %10, %cst_8 {dimension_numbers = #tpu.dot_dimension_numbers<[1], [0], [0], [1], [0, 0, 1, 1], [], []>} : vector<256x128xbf16>, vector<128x128xbf16>, vector<256x128xf32> -> vector<256x128xf32>
    %c0_9 = arith.constant 0 : index
    %c0_10 = arith.constant 0 : index
    %12 = vector.load %arg5[%c0_9, %c0_10] : memref<1x128xf32, #tpu.memory_space<vmem>>, vector<1x128xf32>
    %13 = vector.broadcast %12 : vector<1x128xf32> to vector<256x128xf32>
    %14 = arith.addf %11, %13 : vector<256x128xf32>
    %cst_11 = arith.constant 0.000000e+00 : f32
    %15 = vector.broadcast %cst_11 : f32 to vector<256x128xf32>
    %16 = arith.maximumf %14, %15 : vector<256x128xf32>
    %17 = arith.truncf %16 : vector<256x128xf32> to vector<256x128xbf16>
    %c0_12 = arith.constant 0 : index
    %c0_13 = arith.constant 0 : index
    %18 = vector.load %arg6[%c0_12, %c0_13] : memref<128x128xbf16, #tpu.memory_space<vmem>>, vector<128x128xbf16>
    %cst_14 = arith.constant dense<0.000000e+00> : vector<256x128xf32>
    %19 = tpu.matmul %17, %18, %cst_14 {dimension_numbers = #tpu.dot_dimension_numbers<[1], [0], [0], [1], [0, 0, 1, 1], [], []>} : vector<256x128xbf16>, vector<128x128xbf16>, vector<256x128xf32> -> vector<256x128xf32>
    %c0_15 = arith.constant 0 : index
    %c0_16 = arith.constant 0 : index
    %20 = vector.load %arg7[%c0_15, %c0_16] : memref<1x128xf32, #tpu.memory_space<vmem>>, vector<1x128xf32>
    %21 = vector.broadcast %20 : vector<1x128xf32> to vector<256x128xf32>
    %22 = arith.addf %19, %21 : vector<256x128xf32>
    %cst_17 = arith.constant 0.000000e+00 : f32
    %23 = vector.broadcast %cst_17 : f32 to vector<256x128xf32>
    %24 = arith.maximumf %22, %23 : vector<256x128xf32>
    %25 = arith.truncf %24 : vector<256x128xf32> to vector<256x128xbf16>
    %c0_18 = arith.constant 0 : index
    %c0_19 = arith.constant 0 : index
    %26 = vector.load %arg8[%c0_18, %c0_19] : memref<128x128xbf16, #tpu.memory_space<vmem>>, vector<128x128xbf16>
    %cst_20 = arith.constant dense<0.000000e+00> : vector<256x128xf32>
    %27 = tpu.matmul %25, %26, %cst_20 {dimension_numbers = #tpu.dot_dimension_numbers<[1], [0], [0], [1], [0, 0, 1, 1], [], []>} : vector<256x128xbf16>, vector<128x128xbf16>, vector<256x128xf32> -> vector<256x128xf32>
    %c0_21 = arith.constant 0 : index
    %c0_22 = arith.constant 0 : index
    %28 = vector.load %arg9[%c0_21, %c0_22] : memref<1x128xf32, #tpu.memory_space<vmem>>, vector<1x128xf32>
    %29 = vector.broadcast %28 : vector<1x128xf32> to vector<256x128xf32>
    %30 = arith.addf %27, %29 : vector<256x128xf32>
    %31 = arith.truncf %30 : vector<256x128xf32> to vector<256x128xbf16>
    %c0_23 = arith.constant 0 : index
    %c0_24 = arith.constant 0 : index
    %32 = vector.load %arg10[%c0_23, %c0_24] : memref<256x128xbf16, #tpu.memory_space<vmem>>, vector<256x128xbf16>
    tpu.vector_store %arg10[%c0_23, %c0_24], %31 {strides = array<i32>} : memref<256x128xbf16, #tpu.memory_space<vmem>>, vector<256x128xbf16>,
    return
  }
  func.func @transform_0(%arg0: i32) -> (i32, i32) {
    %c0_i32 = arith.constant 0 : i32
    %c0_i32_0 = arith.constant 0 : i32
    return %arg0, %c0_i32 : i32, i32
  }
  func.func @transform_1(%arg0: i32) -> (i32, i32) {
    %c0_i32 = arith.constant 0 : i32
    %c0_i32_0 = arith.constant 0 : i32
    %c0_i32_1 = arith.constant 0 : i32
    return %c0_i32, %c0_i32_0 : i32, i32
  }
  func.func @transform_2(%arg0: i32) -> (i32, i32) {
    %c0_i32 = arith.constant 0 : i32
    %c0_i32_0 = arith.constant 0 : i32
    %c0_i32_1 = arith.constant 0 : i32
    return %c0_i32, %c0_i32_0 : i32, i32
  }
  func.func @transform_3(%arg0: i32) -> (i32, i32) {
    %c0_i32 = arith.constant 0 : i32
    %c0_i32_0 = arith.constant 0 : i32
    %c0_i32_1 = arith.constant 0 : i32
    return %c0_i32, %c0_i32_0 : i32, i32
  }
  func.func @transform_4(%arg0: i32) -> (i32, i32) {
    %c0_i32 = arith.constant 0 : i32
    %c0_i32_0 = arith.constant 0 : i32
    %c0_i32_1 = arith.constant 0 : i32
    return %c0_i32, %c0_i32_0 : i32, i32
  }
  func.func @transform_5(%arg0: i32) -> (i32, i32) {
    %c0_i32 = arith.constant 0 : i32
    %c0_i32_0 = arith.constant 0 : i32
    %c0_i32_1 = arith.constant 0 : i32
    return %c0_i32, %c0_i32_0 : i32, i32
  }
  func.func @transform_6(%arg0: i32) -> (i32, i32) {
    %c0_i32 = arith.constant 0 : i32
    %c0_i32_0 = arith.constant 0 : i32
    %c0_i32_1 = arith.constant 0 : i32
    return %c0_i32, %c0_i32_0 : i32, i32
  }
  func.func @transform_7(%arg0: i32) -> (i32, i32) {
    %c0_i32 = arith.constant 0 : i32
    %c0_i32_0 = arith.constant 0 : i32
    %c0_i32_1 = arith.constant 0 : i32
    return %c0_i32, %c0_i32_0 : i32, i32
  }
  func.func @transform_8(%arg0: i32) -> (i32, i32) {
    %c0_i32 = arith.constant 0 : i32
    %c0_i32_0 = arith.constant 0 : i32
    %c0_i32_1 = arith.constant 0 : i32
    return %c0_i32, %c0_i32_0 : i32, i32
  }
  func.func @transform_9(%arg0: i32) -> (i32, i32) {
    %c0_i32 = arith.constant 0 : i32
    %c0_i32_0 = arith.constant 0 : i32
    return %arg0, %c0_i32 : i32, i32
  }
}

</mosaic_0001>

<llo_original>
// kernel: tpu_custom_call.1
$region0: #{tpu_custom_call.1}
  #allocation0 [shape = 'u32[]', space=smem, size = 0x4, offset = 0x4, fixed_abs, tag = 'smem constant byte address 0x4 - core index']
  #allocation1 [shape = 'u32[72,128]{1,0:T(1,128)}', space=vmem, size = 0x9000, scoped, tag = 'internal scratch']
  %s0 = inlined_call_operand.vmem [shape: f32[500,32], index: 0, kind: input, shape index: {}]
  %s1 = inlined_call_operand.vmem [shape: bf16[32,128], index: 1, kind: input, shape index: {}]
  %s2 = inlined_call_operand.vmem [shape: f32[1,128], index: 2, kind: input, shape index: {}]
  %s3 = inlined_call_operand.vmem [shape: bf16[128,128], index: 3, kind: input, shape index: {}]
  %s4 = inlined_call_operand.vmem [shape: f32[1,128], index: 4, kind: input, shape index: {}]
  %s5 = inlined_call_operand.vmem [shape: bf16[128,128], index: 5, kind: input, shape index: {}]
  %s6 = inlined_call_operand.vmem [shape: f32[1,128], index: 6, kind: input, shape index: {}]
  %s7 = inlined_call_operand.vmem [shape: bf16[128,128], index: 7, kind: input, shape index: {}]
  %s8 = inlined_call_operand.vmem [shape: f32[1,128], index: 8, kind: input, shape index: {}]
  %s9 = inlined_call_operand.hbm [shape: bf16[500,128], index: 9, kind: output, shape index: {}]
  %s10 = sld [smem:[#allocation0]]
  $region69: #{tpu_custom_call.1} parent=0
    _
  %s12 = ssub.s32 1, %s10
  %s13 = scalar_select 0, %s12, %s10
  $region1: #{tpu_custom_call.1} parent=0
    #allocation2 [shape = 'u8[131072]{0}', space=vmem, size = 0x20000, scoped, tag = 'output window, operand 0']
    #allocation3 [shape = 's32[2]{0}', space=sflag, size = 0x8, scoped, tag = 'scoped memory for tpu_custom_call.1']
    %14 = vsyncpa [#allocation3], 0
    %s15 = scalar_lea.sflag [#allocation3], 1
    %16 = vsyncpa %s15, 0
    loop: start=0, step=1, limit=4
    $region2: #{tpu_custom_call.1} parent=1 // loop_pre_header
      _
    $region3: #{tpu_custom_call.1} parent=1 // loop_header
      %s18 = sphi 0, %s22
      %p19 = scmp.ge.s32.totalorder %s18, 4
      %s28 = sphi 0, %s30
      %s31 = sphi 0, %s28
      %s32 = sphi 0, %s31
      %s48 = sphi 0, %s32
      %s52 = sphi 0, %s52
      %s54 = sphi 0, %s52
      %s55 = sphi 0, %s54
      %s69 = sphi 0, %s55
      %s73 = sphi 0, %s73
      %s75 = sphi 0, %s73
      %s76 = sphi 0, %s75
      %s90 = sphi 0, %s76
      %s94 = sphi 0, %s94
      %s96 = sphi 0, %s94
      %s97 = sphi 0, %s96
      %s111 = sphi 0, %s97
      %s115 = sphi 0, %s115
      %s117 = sphi 0, %s115
      %s118 = sphi 0, %s117
      %s132 = sphi 0, %s118
      %s136 = sphi 0, %s136
      %s138 = sphi 0, %s136
      %s139 = sphi 0, %s138
      %s153 = sphi 0, %s139
      %s157 = sphi 0, %s157
      %s159 = sphi 0, %s157
      %s160 = sphi 0, %s159
      %s174 = sphi 0, %s160
      %s178 = sphi 0, %s178
      %s180 = sphi 0, %s178
      %s181 = sphi 0, %s180
      %s195 = sphi 0, %s181
      %s199 = sphi 0, %s199
      %s201 = sphi 0, %s199
      %s202 = sphi 0, %s201
      %s216 = sphi 0, %s202
      %s222 = sphi 0, %s224
      %s225 = sphi 0, %s222
      %s226 = sphi 0, %s225
      %s242 = sphi 0, %s226
    $region4: #{tpu_custom_call.1} parent=1 // loop_header_branch
      %21 = sbr.rel (%p19) target = $region8
    $region5: #{tpu_custom_call.1} parent=1 // loop_body
      %s23 = ssub.s32 %s18, 1
      %s24 = ssub.s32 %s18, 2
      %s25 = sadd.s32 %s18, 1
      %s26 = ssub.s32 %s18, %s25
      %p27 = scmp.eq.s32.totalorder %s26, 0
      %s29 = sadd.s32 %s28, 1
      %s30 = scalar_select %p27, %s28, %s29
      %p33 = pneg %p27
      %p34 = scmp.eq.s32.totalorder %s18, 1
      %p35 = por %p33, %p34
      %p36 = scmp.ne.s32.totalorder %s28, %s31
      %p37 = scmp.eq.s32.totalorder %s18, 0
      %p38 = por %p36, %p37
      %p39 = scmp.ne.s32.totalorder %s28, %s31
      %p40 = scmp.eq.s32.totalorder %s23, 1
      %p41 = por %p39, %p40
      %p42 = scmp.ne.s32.totalorder %s31, %s32
      %p43 = scmp.eq.s32.totalorder %s23, 0
      %p44 = por %p42, %p43
      %p45 = scmp.ne.s32.totalorder %s31, %s32
      %p46 = scmp.eq.s32.totalorder %s24, 1
      %p47 = por %p45, %p46
      %p49 = scmp.ne.s32.totalorder %s32, %s48
      %p50 = scmp.eq.s32.totalorder %s24, 0
      %p51 = por %p49, %p50
      %s53 = sadd.s32 %s52, 1
      %p56 = scmp.eq.s32.totalorder %s18, 1
      %p57 = scmp.ne.s32.totalorder %s52, %s54
      %p58 = scmp.eq.s32.totalorder %s18, 0
      %p59 = por %p57, %p58
      %p60 = scmp.ne.s32.totalorder %s52, %s54
      %p61 = scmp.eq.s32.totalorder %s23, 1
      %p62 = por %p60, %p61
      %p63 = scmp.ne.s32.totalorder %s54, %s55
      %p64 = scmp.eq.s32.totalorder %s23, 0
      %p65 = por %p63, %p64
      %p66 = scmp.ne.s32.totalorder %s54, %s55
      %p67 = scmp.eq.s32.totalorder %s24, 1
      %p68 = por %p66, %p67
      %p70 = scmp.ne.s32.totalorder %s55, %s69
      %p71 = scmp.eq.s32.totalorder %s24, 0
      %p72 = por %p70, %p71
      %s74 = sadd.s32 %s73, 1
      %p77 = scmp.eq.s32.totalorder %s18, 1
      %p78 = scmp.ne.s32.totalorder %s73, %s75
      %p79 = scmp.eq.s32.totalorder %s18, 0
      %p80 = por %p78, %p79
      %p81 = scmp.ne.s32.totalorder %s73, %s75
      %p82 = scmp.eq.s32.totalorder %s23, 1
      %p83 = por %p81, %p82
      %p84 = scmp.ne.s32.totalorder %s75, %s76
      %p85 = scmp.eq.s32.totalorder %s23, 0
      %p86 = por %p84, %p85
      %p87 = scmp.ne.s32.totalorder %s75, %s76
      %p88 = scmp.eq.s32.totalorder %s24, 1
      %p89 = por %p87, %p88
      %p91 = scmp.ne.s32.totalorder %s76, %s90
      %p92 = scmp.eq.s32.totalorder %s24, 0
      %p93 = por %p91, %p92
      %s95 = sadd.s32 %s94, 1
      %p98 = scmp.eq.s32.totalorder %s18, 1
      %p99 = scmp.ne.s32.totalorder %s94, %s96
      %p100 = scmp.eq.s32.totalorder %s18, 0
      %p101 = por %p99, %p100
      %p102 = scmp.ne.s32.totalorder %s94, %s96
      %p103 = scmp.eq.s32.totalorder %s23, 1
      %p104 = por %p102, %p103
      %p105 = scmp.ne.s32.totalorder %s96, %s97
      %p106 = scmp.eq.s32.totalorder %s23, 0
      %p107 = por %p105, %p106
      %p108 = scmp.ne.s32.totalorder %s96, %s97
      %p109 = scmp.eq.s32.totalorder %s24, 1
      %p110 = por %p108, %p109
      %p112 = scmp.ne.s32.totalorder %s97, %s111
      %p113 = scmp.eq.s32.totalorder %s24, 0
      %p114 = por %p112, %p113
      %s116 = sadd.s32 %s115, 1
      %p119 = scmp.eq.s32.totalorder %s18, 1
      %p120 = scmp.ne.s32.totalorder %s115, %s117
      %p121 = scmp.eq.s32.totalorder %s18, 0
      %p122 = por %p120, %p121
      %p123 = scmp.ne.s32.totalorder %s115, %s117
      %p124 = scmp.eq.s32.totalorder %s23, 1
      %p125 = por %p123, %p124
      %p126 = scmp.ne.s32.totalorder %s117, %s118
      %p127 = scmp.eq.s32.totalorder %s23, 0
      %p128 = por %p126, %p127
      %p129 = scmp.ne.s32.totalorder %s117, %s118
      %p130 = scmp.eq.s32.totalorder %s24, 1
      %p131 = por %p129, %p130
      %p133 = scmp.ne.s32.totalorder %s118, %s132
      %p134 = scmp.eq.s32.totalorder %s24, 0
      %p135 = por %p133, %p134
      %s137 = sadd.s32 %s136, 1
      %p140 = scmp.eq.s32.totalorder %s18, 1
      %p141 = scmp.ne.s32.totalorder %s136, %s138
      %p142 = scmp.eq.s32.totalorder %s18, 0
      %p143 = por %p141, %p142
      %p144 = scmp.ne.s32.totalorder %s136, %s138
      %p145 = scmp.eq.s32.totalorder %s23, 1
      %p146 = por %p144, %p145
      %p147 = scmp.ne.s32.totalorder %s138, %s139
      %p148 = scmp.eq.s32.totalorder %s23, 0
      %p149 = por %p147, %p148
      %p150 = scmp.ne.s32.totalorder %s138, %s139
      %p151 = scmp.eq.s32.totalorder %s24, 1
      %p152 = por %p150, %p151
      %p154 = scmp.ne.s32.totalorder %s139, %s153
      %p155 = scmp.eq.s32.totalorder %s24, 0
      %p156 = por %p154, %p155
      %s158 = sadd.s32 %s157, 1
      %p161 = scmp.eq.s32.totalorder %s18, 1
      %p162 = scmp.ne.s32.totalorder %s157, %s159
      %p163 = scmp.eq.s32.totalorder %s18, 0
      %p164 = por %p162, %p163
      %p165 = scmp.ne.s32.totalorder %s157, %s159
      %p166 = scmp.eq.s32.totalorder %s23, 1
      %p167 = por %p165, %p166
      %p168 = scmp.ne.s32.totalorder %s159, %s160
      %p169 = scmp.eq.s32.totalorder %s23, 0
      %p170 = por %p168, %p169
      %p171 = scmp.ne.s32.totalorder %s159, %s160
      %p172 = scmp.eq.s32.totalorder %s24, 1
      %p173 = por %p171, %p172
      %p175 = scmp.ne.s32.totalorder %s160, %s174
      %p176 = scmp.eq.s32.totalorder %s24, 0
      %p177 = por %p175, %p176
      %s179 = sadd.s32 %s178, 1
      %p182 = scmp.eq.s32.totalorder %s18, 1
      %p183 = scmp.ne.s32.totalorder %s178, %s180
      %p184 = scmp.eq.s32.totalorder %s18, 0
      %p185 = por %p183, %p184
      %p186 = scmp.ne.s32.totalorder %s178, %s180
      %p187 = scmp.eq.s32.totalorder %s23, 1
      %p188 = por %p186, %p187
      %p189 = scmp.ne.s32.totalorder %s180, %s181
      %p190 = scmp.eq.s32.totalorder %s23, 0
      %p191 = por %p189, %p190
      %p192 = scmp.ne.s32.totalorder %s180, %s181
      %p193 = scmp.eq.s32.totalorder %s24, 1
      %p194 = por %p192, %p193
      %p196 = scmp.ne.s32.totalorder %s181, %s195
      %p197 = scmp.eq.s32.totalorder %s24, 0
      %p198 = por %p196, %p197
      %s200 = sadd.s32 %s199, 1
      %p203 = scmp.eq.s32.totalorder %s18, 1
      %p204 = scmp.ne.s32.totalorder %s199, %s201
      %p205 = scmp.eq.s32.totalorder %s18, 0
      %p206 = por %p204, %p205
      %p207 = scmp.ne.s32.totalorder %s199, %s201
      %p208 = scmp.eq.s32.totalorder %s23, 1
      %p209 = por %p207, %p208
      %p210 = scmp.ne.s32.totalorder %s201, %s202
      %p211 = scmp.eq.s32.totalorder %s23, 0
      %p212 = por %p210, %p211
      %p213 = scmp.ne.s32.totalorder %s201, %s202
      %p214 = scmp.eq.s32.totalorder %s24, 1
      %p215 = por %p213, %p214
      %p217 = scmp.ne.s32.totalorder %s202, %s216
      %p218 = scmp.eq.s32.totalorder %s24, 0
      %p219 = por %p217, %p218
      %s220 = ssub.s32 %s18, %s25
      %p221 = scmp.eq.s32.totalorder %s220, 0
      %s223 = sadd.s32 %s222, 1
      %s224 = scalar_select %p221, %s222, %s223
      %p227 = pneg %p221
      %p228 = scmp.eq.s32.totalorder %s18, 1
      %p229 = por %p227, %p228
      %p230 = scmp.ne.s32.totalorder %s222, %s225
      %p231 = scmp.eq.s32.totalorder %s18, 0
      %p232 = por %p230, %p231
      %p233 = scmp.ne.s32.totalorder %s222, %s225
      %p234 = scmp.eq.s32.totalorder %s23, 1
      %p235 = por %p233, %p234
      %p236 = scmp.ne.s32.totalorder %s225, %s226
      %p237 = scmp.eq.s32.totalorder %s23, 0
      %p238 = por %p236, %p237
      %p239 = scmp.ne.s32.totalorder %s225, %s226
      %p240 = scmp.eq.s32.totalorder %s24, 1
      %p241 = por %p239, %p240
      %p243 = scmp.ne.s32.totalorder %s226, %s242
      %p244 = scmp.eq.s32.totalorder %s24, 0
      %p245 = por %p243, %p244
      %p246 = scmp.le.s32.totalorder 1, %s18
      %p247 = scmp.lt.s32.totalorder %s18, 3
      %p248 = pnand %p246, %p247
      %p249 = pneg %p248
      // Predicated region
      $region9: #{tpu_custom_call.1} parent=5 // pred_check
        _
      $region10: #{tpu_custom_call.1} parent=5 // pred_check_branch
        %251 = sbr.rel (%p248) target = $region12
      $region11: #{tpu_custom_call.1} parent=5 // pred_region
        %s252 = ssub.s32 %s18, 1
        // Predicated region
        $region13: #{tpu_custom_call.1} parent=11 // pred_check
          %p253 = pneg %p65
        $region14: #{tpu_custom_call.1} parent=11 // pred_check_branch
          %255 = sbr.rel (%p253) target = $region16
        $region15: #{tpu_custom_call.1} parent=11 // pred_region
          _
        $region16: #{tpu_custom_call.1} parent=11 // pred_fallthru
          _
        // Predicated region
        $region17: #{tpu_custom_call.1} parent=11 // pred_check
          %p256 = pneg %p86
        $region18: #{tpu_custom_call.1} parent=11 // pred_check_branch
          %258 = sbr.rel (%p256) target = $region20
        $region19: #{tpu_custom_call.1} parent=11 // pred_region
          _
        $region20: #{tpu_custom_call.1} parent=11 // pred_fallthru
          _
        // Predicated region
        $region21: #{tpu_custom_call.1} parent=11 // pred_check
          %p259 = pneg %p107
        $region22: #{tpu_custom_call.1} parent=11 // pred_check_branch
          %261 = sbr.rel (%p259) target = $region24
        $region23: #{tpu_custom_call.1} parent=11 // pred_region
          _
        $region24: #{tpu_custom_call.1} parent=11 // pred_fallthru
          _
        // Predicated region
        $region25: #{tpu_custom_call.1} parent=11 // pred_check
          %p262 = pneg %p128
        $region26: #{tpu_custom_call.1} parent=11 // pred_check_branch
          %264 = sbr.rel (%p262) target = $region28
        $region27: #{tpu_custom_call.1} parent=11 // pred_region
          _
        $region28: #{tpu_custom_call.1} parent=11 // pred_fallthru
          _
        // Predicated region
        $region29: #{tpu_custom_call.1} parent=11 // pred_check
          %p265 = pneg %p149
        $region30: #{tpu_custom_call.1} parent=11 // pred_check_branch
          %267 = sbr.rel (%p265) target = $region32
        $region31: #{tpu_custom_call.1} parent=11 // pred_region
          _
        $region32: #{tpu_custom_call.1} parent=11 // pred_fallthru
          _
        // Predicated region
        $region33: #{tpu_custom_call.1} parent=11 // pred_check
          %p268 = pneg %p170
        $region34: #{tpu_custom_call.1} parent=11 // pred_check_branch
          %270 = sbr.rel (%p268) target = $region36
        $region35: #{tpu_custom_call.1} parent=11 // pred_region
          _
        $region36: #{tpu_custom_call.1} parent=11 // pred_fallthru
          _
        // Predicated region
        $region37: #{tpu_custom_call.1} parent=11 // pred_check
          %p271 = pneg %p191
        $region38: #{tpu_custom_call.1} parent=11 // pred_check_branch
          %273 = sbr.rel (%p271) target = $region40
        $region39: #{tpu_custom_call.1} parent=11 // pred_region
          _
        $region40: #{tpu_custom_call.1} parent=11 // pred_fallthru
          _
        // Predicated region
        $region41: #{tpu_custom_call.1} parent=11 // pred_check
          %p274 = pneg %p212
        $region42: #{tpu_custom_call.1} parent=11 // pred_check_branch
          %276 = sbr.rel (%p274) target = $region44
        $region43: #{tpu_custom_call.1} parent=11 // pred_region
          _
        $region44: #{tpu_custom_call.1} parent=11 // pred_fallthru
          _
      $region12: #{tpu_custom_call.1} parent=5 // pred_fallthru
        _
      %p277 = scmp.lt.s32.totalorder %s18, 2
      // Predicated region
      $region45: #{tpu_custom_call.1} parent=5 // pred_check
        %p278 = pneg %p277
      $region46: #{tpu_custom_call.1} parent=5 // pred_check_branch
        %280 = sbr.rel (%p278) target = $region48
      $region47: #{tpu_custom_call.1} parent=5 // pred_region
        // Predicated region
        $region49: #{tpu_custom_call.1} parent=47 // pred_check
          %p281 = pneg %p38
        $region50: #{tpu_custom_call.1} parent=47 // pred_check_branch
          %283 = sbr.rel (%p281) target = $region52
        $region51: #{tpu_custom_call.1} parent=47 // pred_region
          %s284 = smul.u32 32, %s18
          %s285 = ssub.s32 63, %s284
          %p286 = scmp.lt.s32.totalorder %s285, 32
          %s287 = scalar_select %p286, %s285, 32
          %s288 = smul.u32 8, %s287
          %p289 = scmp.lt.s32.totalorder %s284, 62
          %s290 = scalar_select %p289, %s284, 62
          %s291 = smul.addr %s290, 8
          %s292 = scalar_lea.vmem %s0, %s291
          %s293 = smul.u32 32, %s18
          %s294 = ssub.s32 63, %s293
          %p295 = scmp.lt.s32.totalorder %s294, 32
          %s296 = scalar_select %p295, %s294, 32
          %s297 = smul.u32 8, %s296
        $region52: #{tpu_custom_call.1} parent=47 // pred_fallthru
          _
      $region48: #{tpu_custom_call.1} parent=5 // pred_fallthru
        _
      %p298 = scmp.le.s32.totalorder 1, %s18
      %p299 = scmp.lt.s32.totalorder %s18, 3
      %p300 = pnand %p298, %p299
      %p301 = pneg %p300
      // Predicated region
      $region53: #{tpu_custom_call.1} parent=5 // pred_check
        _
      $region54: #{tpu_custom_call.1} parent=5 // pred_check_branch
        %303 = sbr.rel (%p300) target = $region56
      $region55: #{tpu_custom_call.1} parent=5 // pred_region
        %s304 = ssub.s32 %s18, 1
        %s305 = smul.u32 32, %s23
        %s306 = ssub.s32 63, %s305
        %p307 = scmp.lt.s32.totalorder %s306, 32
        %s308 = scalar_select %p307, %s306, 32
        %s309 = smul.u32 8, %s308
        %p310 = scmp.lt.s32.totalorder %s305, 62
        %s311 = scalar_select %p310, %s305, 62
        %s312 = smul.addr %s311, 8
        %s313 = scalar_lea.vmem %s0, %s312
        %p314 = pneg %p44
        %p315 = pneg %p41
        %p316 = pneg %p65
        %p317 = pneg %p62
        %p318 = pneg %p86
        %p319 = pneg %p83
        %p320 = pneg %p107
        %p321 = pneg %p104
        %p322 = pneg %p128
        %p323 = pneg %p125
        %p324 = pneg %p149
        %p325 = pneg %p146
        %p326 = pneg %p170
        %p327 = pneg %p167
        %p328 = pneg %p191
        %p329 = pneg %p188
        %p330 = pneg %p212
        %p331 = pneg %p209
        %p332 = pneg %p238
        %p333 = pneg %p235
        %s334 = sand.u32 %s225, 1
        %s335 = scalar_lea.sflag [#allocation3], %s334
        %s336 = sand.u32 %s225, 1
        %s337 = smul.addr %s336, 128
        %s338 = scalar_lea.vmem [#allocation2], %s337
        %s339 = smul.u32 32, %s23
        %s340 = ssub.s32 63, %s339
        %p341 = scmp.lt.s32.totalorder %s340, 32
        %s342 = scalar_select %p341, %s340, 32
        %s343 = smul.u32 8, %s342
        %p344 = scmp.lt.s32.totalorder %s339, 62
        %s345 = scalar_select %p344, %s339, 62
        %s346 = smul.addr %s345, 8
        %s347 = scalar_lea.vmem %s0, %s346
        %s348 = smul.u32 32, %s23
        %s349 = ssub.s32 63, %s348
        %p350 = scmp.lt.s32.totalorder %s349, 32
        %s351 = scalar_select %p350, %s349, 32
        %s352 = smul.u32 8, %s351
        %s353 = smul.u32 32, %s23
        %s354 = ssub.s32 63, %s353
        %p355 = scmp.lt.s32.totalorder %s354, 32
        %s356 = scalar_select %p355, %s354, 32
        %s357 = smul.u32 4, %s356
        %v359 = vld [vmem:[%s347] sm:$0xff]
        %v360 = vld [vmem:[%s347 + $0x8] sm:$0xff]
        %v361 = vld [vmem:[%s347 + $0x10] sm:$0xff]
        %v362 = vld [vmem:[%s347 + $0x18] sm:$0xff]
        %v363 = vld [vmem:[%s347 + $0x20] sm:$0xff]
        %v364 = vld [vmem:[%s347 + $0x28] sm:$0xff]
        %v365 = vld [vmem:[%s347 + $0x30] sm:$0xff]
        %v366 = vld [vmem:[%s347 + $0x38] sm:$0xff]
        %v367 = vld [vmem:[%s347 + $0x40] sm:$0xff]
        %v368 = vld [vmem:[%s347 + $0x48] sm:$0xff]
        %v369 = vld [vmem:[%s347 + $0x50] sm:$0xff]
        %v370 = vld [vmem:[%s347 + $0x58] sm:$0xff]
        %v371 = vld [vmem:[%s347 + $0x60] sm:$0xff]
        %v372 = vld [vmem:[%s347 + $0x68] sm:$0xff]
        %v373 = vld [vmem:[%s347 + $0x70] sm:$0xff]
        %v374 = vld [vmem:[%s347 + $0x78] sm:$0xff]
        %v375 = vld [vmem:[%s347 + $0x80] sm:$0xff]
        %v376 = vld [vmem:[%s347 + $0x88] sm:$0xff]
        %v377 = vld [vmem:[%s347 + $0x90] sm:$0xff]
        %v378 = vld [vmem:[%s347 + $0x98] sm:$0xff]
        %v379 = vld [vmem:[%s347 + $0xa0] sm:$0xff]
        %v380 = vld [vmem:[%s347 + $0xa8] sm:$0xff]
        %v381 = vld [vmem:[%s347 + $0xb0] sm:$0xff]
        %v382 = vld [vmem:[%s347 + $0xb8] sm:$0xff]
        %v383 = vld [vmem:[%s347 + $0xc0] sm:$0xff]
        %v384 = vld [vmem:[%s347 + $0xc8] sm:$0xff]
        %v385 = vld [vmem:[%s347 + $0xd0] sm:$0xff]
        %v386 = vld [vmem:[%s347 + $0xd8] sm:$0xff]
        %v387 = vld [vmem:[%s347 + $0xe0] sm:$0xff]
        %v388 = vld [vmem:[%s347 + $0xe8] sm:$0xff]
        %v389 = vld [vmem:[%s347 + $0xf0] sm:$0xff]
        %v390 = vld [vmem:[%s347 + $0xf8] sm:$0xff]
        %v391 = vpack.c.bf16 %v360, %v359
        %v392 = vpack.c.bf16 %v362, %v361
        %v393 = vpack.c.bf16 %v364, %v363
        %v394 = vpack.c.bf16 %v366, %v365
        %v395 = vpack.c.bf16 %v368, %v367
        %v396 = vpack.c.bf16 %v370, %v369
        %v397 = vpack.c.bf16 %v372, %v371
        %v398 = vpack.c.bf16 %v374, %v373
        %v399 = vpack.c.bf16 %v376, %v375
        %v400 = vpack.c.bf16 %v378, %v377
        %v401 = vpack.c.bf16 %v380, %v379
        %v402 = vpack.c.bf16 %v382, %v381
        %v403 = vpack.c.bf16 %v384, %v383
        %v404 = vpack.c.bf16 %v386, %v385
        %v405 = vpack.c.bf16 %v388, %v387
        %v406 = vpack.c.bf16 %v390, %v389
        %v407 = vld [vmem:[%s1] sm:$0xf]
        %v408 = vld [vmem:[%s1 + $0x4] sm:$0xf]
        %v409 = vld [vmem:[%s1 + $0x8] sm:$0xf]
        %v410 = vld [vmem:[%s1 + $0xc] sm:$0xf]
        %v411 = vld [vmem:[%s2] sm:$0x1]
        %v413 = vperm.slane %v411, 0
        %v419 = vunpack.c.l.b16 %v407
        %v420 = vunpack.c.l.b16 %v408
        %v421 = vunpack.c.l.b16 %v409
        %v422 = vunpack.c.l.b16 %v410
        %v423 = vpack.c.b16 %v420, %v419
        %v424 = vpack.c.b16 %v422, %v421
        %vm427 = vcmask 261120
        %v429 = vsel %vm427, %v391, 0
        %v432 = vsel %vm427, %v392, 0
        %v435 = vsel %vm427, %v393, 0
        %v438 = vsel %vm427, %v394, 0
        %v441 = vsel %vm427, %v395, 0
        %v444 = vsel %vm427, %v396, 0
        %v447 = vsel %vm427, %v397, 0
        %v450 = vsel %vm427, %v398, 0
        %v453 = vsel %vm427, %v399, 0
        %v456 = vsel %vm427, %v400, 0
        %v459 = vsel %vm427, %v401, 0
        %v462 = vsel %vm427, %v402, 0
        %v465 = vsel %vm427, %v403, 0
        %v468 = vsel %vm427, %v404, 0
        %v471 = vsel %vm427, %v405, 0
        %v474 = vsel %vm427, %v406, 0
        %476 = vmatpush.bf16.msra.mxu0 0
        %477 = vmatpush.bf16.msra.mxu0 0
        %478 = vmatpush.bf16.msra.mxu0 0
        %479 = vmatpush.bf16.msra.mxu0 0
        %480 = vmatpush.bf16.msra.mxu0 0
        %481 = vmatpush.bf16.msra.mxu0 0
        %482 = vmatpush.bf16.msra.mxu0 %v424
        %483 = vmatpush.bf16.msra.mxu0 %v423
        %484 = vmatmul.bf16.gmra.mxu0 %v429
        %v485 = vpop.f32.mrf.mxu0
        %v486 = vadd.f32 %v413, %v485
        %v487 = vpop.f32.mrf.mxu0
        %v488 = vadd.f32 %v413, %v487
        %489 = vmatmul.bf16.gmra.mxu0 %v432
        %v490 = vpop.f32.mrf.mxu0
        %v491 = vadd.f32 %v413, %v490
        %v492 = vpop.f32.mrf.mxu0
        %v493 = vadd.f32 %v413, %v492
        %494 = vmatmul.bf16.gmra.mxu0 %v435
        %v495 = vpop.f32.mrf.mxu0
        %v496 = vadd.f32 %v413, %v495
        %v497 = vpop.f32.mrf.mxu0
        %v498 = vadd.f32 %v413, %v497
        %499 = vmatmul.bf16.gmra.mxu0 %v438
        %v500 = vpop.f32.mrf.mxu0
        %v501 = vadd.f32 %v413, %v500
        %v502 = vpop.f32.mrf.mxu0
        %v503 = vadd.f32 %v413, %v502
        %504 = vmatmul.bf16.gmra.mxu0 %v441
        %v505 = vpop.f32.mrf.mxu0
        %v506 = vadd.f32 %v413, %v505
        %v507 = vpop.f32.mrf.mxu0
        %v508 = vadd.f32 %v413, %v507
        %509 = vmatmul.bf16.gmra.mxu0 %v444
        %v510 = vpop.f32.mrf.mxu0
        %v511 = vadd.f32 %v413, %v510
        %v512 = vpop.f32.mrf.mxu0
        %v513 = vadd.f32 %v413, %v512
        %514 = vmatmul.bf16.gmra.mxu0 %v447
        %v515 = vpop.f32.mrf.mxu0
        %v516 = vadd.f32 %v413, %v515
        %v517 = vpop.f32.mrf.mxu0
        %v518 = vadd.f32 %v413, %v517
        %519 = vmatmul.bf16.gmra.mxu0 %v450
        %v520 = vpop.f32.mrf.mxu0
        %v521 = vadd.f32 %v413, %v520
        %v522 = vpop.f32.mrf.mxu0
        %v523 = vadd.f32 %v413, %v522
        %524 = vmatmul.bf16.gmra.mxu0 %v453
        %v525 = vpop.f32.mrf.mxu0
        %v526 = vadd.f32 %v413, %v525
        %v527 = vpop.f32.mrf.mxu0
        %v528 = vadd.f32 %v413, %v527
        %529 = vmatmul.bf16.gmra.mxu0 %v456
        %v530 = vpop.f32.mrf.mxu0
        %v531 = vadd.f32 %v413, %v530
        %v532 = vpop.f32.mrf.mxu0
        %v533 = vadd.f32 %v413, %v532
        %534 = vmatmul.bf16.gmra.mxu0 %v459
        %v535 = vpop.f32.mrf.mxu0
        %v536 = vadd.f32 %v413, %v535
        %v537 = vpop.f32.mrf.mxu0
        %v538 = vadd.f32 %v413, %v537
        %539 = vmatmul.bf16.gmra.mxu0 %v462
        %v540 = vpop.f32.mrf.mxu0
        %v541 = vadd.f32 %v413, %v540
        %v542 = vpop.f32.mrf.mxu0
        %v543 = vadd.f32 %v413, %v542
        %544 = vmatmul.bf16.gmra.mxu0 %v465
        %v545 = vpop.f32.mrf.mxu0
        %v546 = vadd.f32 %v413, %v545
        %v547 = vpop.f32.mrf.mxu0
        %v548 = vadd.f32 %v413, %v547
        %549 = vmatmul.bf16.gmra.mxu0 %v468
        %v550 = vpop.f32.mrf.mxu0
        %v551 = vadd.f32 %v413, %v550
        %v552 = vpop.f32.mrf.mxu0
        %v553 = vadd.f32 %v413, %v552
        %554 = vmatmul.bf16.gmra.mxu0 %v471
        %v555 = vpop.f32.mrf.mxu0
        %v556 = vadd.f32 %v413, %v555
        %v557 = vpop.f32.mrf.mxu0
        %v558 = vadd.f32 %v413, %v557
        %559 = vmatmul.bf16.gmra.mxu0 %v474
        %v560 = vpop.f32.mrf.mxu0
        %v561 = vadd.f32 %v413, %v560
        %v562 = vpop.f32.mrf.mxu0
        %v563 = vadd.f32 %v413, %v562
        %564 = vdwg.mxu0
        %v565 = vmax.f32 %v486, 0.0
        %v566 = vmax.f32 %v488, 0.0
        %v567 = vmax.f32 %v491, 0.0
        %v568 = vmax.f32 %v493, 0.0
        %v569 = vmax.f32 %v496, 0.0
        %v570 = vmax.f32 %v498, 0.0
        %v571 = vmax.f32 %v501, 0.0
        %v572 = vmax.f32 %v503, 0.0
        %v573 = vmax.f32 %v506, 0.0
        %v574 = vmax.f32 %v508, 0.0
        %v575 = vmax.f32 %v511, 0.0
        %v576 = vmax.f32 %v513, 0.0
        %v577 = vmax.f32 %v516, 0.0
        %v578 = vmax.f32 %v518, 0.0
        %v579 = vmax.f32 %v521, 0.0
        %v580 = vmax.f32 %v523, 0.0
        %v581 = vmax.f32 %v526, 0.0
        %v582 = vmax.f32 %v528, 0.0
        %v583 = vmax.f32 %v531, 0.0
        %v584 = vmax.f32 %v533, 0.0
        %v585 = vmax.f32 %v536, 0.0
        %v586 = vmax.f32 %v538, 0.0
        %v587 = vmax.f32 %v541, 0.0
        %v588 = vmax.f32 %v543, 0.0
        %v589 = vmax.f32 %v546, 0.0
        %v590 = vmax.f32 %v548, 0.0
        %v591 = vmax.f32 %v551, 0.0
        %v592 = vmax.f32 %v553, 0.0
        %v593 = vmax.f32 %v556, 0.0
        %v594 = vmax.f32 %v558, 0.0
        %v595 = vmax.f32 %v561, 0.0
        %v596 = vmax.f32 %v563, 0.0
        %v597 = vpack.c.bf16 %v566, %v565
        %v598 = vpack.c.bf16 %v568, %v567
        %v599 = vpack.c.bf16 %v570, %v569
        %v600 = vpack.c.bf16 %v572, %v571
        %v601 = vpack.c.bf16 %v574, %v573
        %v602 = vpack.c.bf16 %v576, %v575
        %v603 = vpack.c.bf16 %v578, %v577
        %v604 = vpack.c.bf16 %v580, %v579
        %v605 = vpack.c.bf16 %v582, %v581
        %v606 = vpack.c.bf16 %v584, %v583
        %v607 = vpack.c.bf16 %v586, %v585
        %v608 = vpack.c.bf16 %v588, %v587
        %v609 = vpack.c.bf16 %v590, %v589
        %v610 = vpack.c.bf16 %v592, %v591
        %v611 = vpack.c.bf16 %v594, %v593
        %v612 = vpack.c.bf16 %v596, %v595
        %v613 = vld [vmem:[%s3] sm:$0xf]
        %v614 = vld [vmem:[%s3 + $0x4] sm:$0xf]
        %v615 = vld [vmem:[%s3 + $0x8] sm:$0xf]
        %v616 = vld [vmem:[%s3 + $0xc] sm:$0xf]
        %v617 = vld [vmem:[%s3 + $0x10] sm:$0xf]
        %v618 = vld [vmem:[%s3 + $0x14] sm:$0xf]
        %v619 = vld [vmem:[%s3 + $0x18] sm:$0xf]
        %v620 = vld [vmem:[%s3 + $0x1c] sm:$0xf]
        %v621 = vld [vmem:[%s3 + $0x20] sm:$0xf]
        %v622 = vld [vmem:[%s3 + $0x24] sm:$0xf]
        %v623 = vld [vmem:[%s3 + $0x28] sm:$0xf]
        %v624 = vld [vmem:[%s3 + $0x2c] sm:$0xf]
        %v625 = vld [vmem:[%s3 + $0x30] sm:$0xf]
        %v626 = vld [vmem:[%s3 + $0x34] sm:$0xf]
        %v627 = vld [vmem:[%s3 + $0x38] sm:$0xf]
        %v628 = vld [vmem:[%s3 + $0x3c] sm:$0xf]
        %v629 = vld [vmem:[%s4] sm:$0x1]
        %v631 = vperm.slane %v629, 0
        %v649 = vunpack.c.l.b16 %v613
        %v650 = vunpack.c.l.b16 %v614
        %v651 = vunpack.c.l.b16 %v615
        %v652 = vunpack.c.l.b16 %v616
        %v653 = vunpack.c.l.b16 %v617
        %v654 = vunpack.c.l.b16 %v618
        %v655 = vunpack.c.l.b16 %v619
        %v656 = vunpack.c.l.b16 %v620
        %v657 = vunpack.c.l.b16 %v621
        %v658 = vunpack.c.l.b16 %v622
        %v659 = vunpack.c.l.b16 %v623
        %v660 = vunpack.c.l.b16 %v624
        %v661 = vunpack.c.l.b16 %v625
        %v662 = vunpack.c.l.b16 %v626
        %v663 = vunpack.c.l.b16 %v627
        %v664 = vunpack.c.l.b16 %v628
        %v665 = vpack.c.b16 %v650, %v649
        %v666 = vpack.c.b16 %v652, %v651
        %v667 = vpack.c.b16 %v654, %v653
        %v668 = vpack.c.b16 %v656, %v655
        %v669 = vpack.c.b16 %v658, %v657
        %v670 = vpack.c.b16 %v660, %v659
        %v671 = vpack.c.b16 %v662, %v661
        %v672 = vpack.c.b16 %v664, %v663
        %681 = vmatpush.bf16.msra.mxu0 %v672
        %682 = vmatpush.bf16.msra.mxu0 %v671
        %683 = vmatpush.bf16.msra.mxu0 %v670
        %684 = vmatpush.bf16.msra.mxu0 %v669
        %685 = vmatpush.bf16.msra.mxu0 %v668
        %686 = vmatpush.bf16.msra.mxu0 %v667
        %687 = vmatpush.bf16.msra.mxu0 %v666
        %688 = vmatpush.bf16.msra.mxu0 %v665
        %689 = vmatmul.bf16.gmra.mxu0 %v597
        %v690 = vpop.f32.mrf.mxu0
        %v691 = vadd.f32 %v631, %v690
        %v692 = vpop.f32.mrf.mxu0
        %v693 = vadd.f32 %v631, %v692
        %694 = vmatmul.bf16.gmra.mxu0 %v598
        %v695 = vpop.f32.mrf.mxu0
        %v696 = vadd.f32 %v631, %v695
        %v697 = vpop.f32.mrf.mxu0
        %v698 = vadd.f32 %v631, %v697
        %699 = vmatmul.bf16.gmra.mxu0 %v599
        %v700 = vpop.f32.mrf.mxu0
        %v701 = vadd.f32 %v631, %v700
        %v702 = vpop.f32.mrf.mxu0
        %v703 = vadd.f32 %v631, %v702
        %704 = vmatmul.bf16.gmra.mxu0 %v600
        %v705 = vpop.f32.mrf.mxu0
        %v706 = vadd.f32 %v631, %v705
        %v707 = vpop.f32.mrf.mxu0
        %v708 = vadd.f32 %v631, %v707
        %709 = vmatmul.bf16.gmra.mxu0 %v601
        %v710 = vpop.f32.mrf.mxu0
        %v711 = vadd.f32 %v631, %v710
        %v712 = vpop.f32.mrf.mxu0
        %v713 = vadd.f32 %v631, %v712
        %714 = vmatmul.bf16.gmra.mxu0 %v602
        %v715 = vpop.f32.mrf.mxu0
        %v716 = vadd.f32 %v631, %v715
        %v717 = vpop.f32.mrf.mxu0
        %v718 = vadd.f32 %v631, %v717
        %719 = vmatmul.bf16.gmra.mxu0 %v603
        %v720 = vpop.f32.mrf.mxu0
        %v721 = vadd.f32 %v631, %v720
        %v722 = vpop.f32.mrf.mxu0
        %v723 = vadd.f32 %v631, %v722
        %724 = vmatmul.bf16.gmra.mxu0 %v604
        %v725 = vpop.f32.mrf.mxu0
        %v726 = vadd.f32 %v631, %v725
        %v727 = vpop.f32.mrf.mxu0
        %v728 = vadd.f32 %v631, %v727
        %729 = vmatmul.bf16.gmra.mxu0 %v605
        %v730 = vpop.f32.mrf.mxu0
        %v731 = vadd.f32 %v631, %v730
        %v732 = vpop.f32.mrf.mxu0
        %v733 = vadd.f32 %v631, %v732
        %734 = vmatmul.bf16.gmra.mxu0 %v606
        %v735 = vpop.f32.mrf.mxu0
        %v736 = vadd.f32 %v631, %v735
        %v737 = vpop.f32.mrf.mxu0
        %v738 = vadd.f32 %v631, %v737
        %739 = vmatmul.bf16.gmra.mxu0 %v607
        %v740 = vpop.f32.mrf.mxu0
        %v741 = vadd.f32 %v631, %v740
        %v742 = vpop.f32.mrf.mxu0
        %v743 = vadd.f32 %v631, %v742
        %744 = vmatmul.bf16.gmra.mxu0 %v608
        %v745 = vpop.f32.mrf.mxu0
        %v746 = vadd.f32 %v631, %v745
        %v747 = vpop.f32.mrf.mxu0
        %v748 = vadd.f32 %v631, %v747
        %749 = vmatmul.bf16.gmra.mxu0 %v609
        %v750 = vpop.f32.mrf.mxu0
        %v751 = vadd.f32 %v631, %v750
        %v752 = vpop.f32.mrf.mxu0
        %v753 = vadd.f32 %v631, %v752
        %754 = vmatmul.bf16.gmra.mxu0 %v610
        %v755 = vpop.f32.mrf.mxu0
        %v756 = vadd.f32 %v631, %v755
        %v757 = vpop.f32.mrf.mxu0
        %v758 = vadd.f32 %v631, %v757
        %759 = vmatmul.bf16.gmra.mxu0 %v611
        %v760 = vpop.f32.mrf.mxu0
        %v761 = vadd.f32 %v631, %v760
        %v762 = vpop.f32.mrf.mxu0
        %v763 = vadd.f32 %v631, %v762
        %764 = vmatmul.bf16.gmra.mxu0 %v612
        %v765 = vpop.f32.mrf.mxu0
        %v766 = vadd.f32 %v631, %v765
        %v767 = vpop.f32.mrf.mxu0
        %v768 = vadd.f32 %v631, %v767
        %769 = vdwg.mxu0
        %v770 = vmax.f32 %v691, 0.0
        %v771 = vmax.f32 %v693, 0.0
        %v772 = vmax.f32 %v696, 0.0
        %v773 = vmax.f32 %v698, 0.0
        %v774 = vmax.f32 %v701, 0.0
        %v775 = vmax.f32 %v703, 0.0
        %v776 = vmax.f32 %v706, 0.0
        %v777 = vmax.f32 %v708, 0.0
        %v778 = vmax.f32 %v711, 0.0
        %v779 = vmax.f32 %v713, 0.0
        %v780 = vmax.f32 %v716, 0.0
        %v781 = vmax.f32 %v718, 0.0
        %v782 = vmax.f32 %v721, 0.0
        %v783 = vmax.f32 %v723, 0.0
        %v784 = vmax.f32 %v726, 0.0
        %v785 = vmax.f32 %v728, 0.0
        %v786 = vmax.f32 %v731, 0.0
        %v787 = vmax.f32 %v733, 0.0
        %v788 = vmax.f32 %v736, 0.0
        %v789 = vmax.f32 %v738, 0.0
        %v790 = vmax.f32 %v741, 0.0
        %v791 = vmax.f32 %v743, 0.0
        %v792 = vmax.f32 %v746, 0.0
        %v793 = vmax.f32 %v748, 0.0
        %v794 = vmax.f32 %v751, 0.0
        %v795 = vmax.f32 %v753, 0.0
        %v796 = vmax.f32 %v756, 0.0
        %v797 = vmax.f32 %v758, 0.0
        %v798 = vmax.f32 %v761, 0.0
        %v799 = vmax.f32 %v763, 0.0
        %v800 = vmax.f32 %v766, 0.0
        %v801 = vmax.f32 %v768, 0.0
        %v802 = vpack.c.bf16 %v771, %v770
        %v803 = vpack.c.bf16 %v773, %v772
        %v804 = vpack.c.bf16 %v775, %v774
        %v805 = vpack.c.bf16 %v777, %v776
        %v806 = vpack.c.bf16 %v779, %v778
        %v807 = vpack.c.bf16 %v781, %v780
        %v808 = vpack.c.bf16 %v783, %v782
        %v809 = vpack.c.bf16 %v785, %v784
        %v810 = vpack.c.bf16 %v787, %v786
        %v811 = vpack.c.bf16 %v789, %v788
        %v812 = vpack.c.bf16 %v791, %v790
        %v813 = vpack.c.bf16 %v793, %v792
        %v814 = vpack.c.bf16 %v795, %v794
        %v815 = vpack.c.bf16 %v797, %v796
        %v816 = vpack.c.bf16 %v799, %v798
        %v817 = vpack.c.bf16 %v801, %v800
        %v818 = vld [vmem:[%s5] sm:$0xf]
        %v819 = vld [vmem:[%s5 + $0x4] sm:$0xf]
        %v820 = vld [vmem:[%s5 + $0x8] sm:$0xf]
        %v821 = vld [vmem:[%s5 + $0xc] sm:$0xf]
        %v822 = vld [vmem:[%s5 + $0x10] sm:$0xf]
        %v823 = vld [vmem:[%s5 + $0x14] sm:$0xf]
        %v824 = vld [vmem:[%s5 + $0x18] sm:$0xf]
        %v825 = vld [vmem:[%s5 + $0x1c] sm:$0xf]
        %v826 = vld [vmem:[%s5 + $0x20] sm:$0xf]
        %v827 = vld [vmem:[%s5 + $0x24] sm:$0xf]
        %v828 = vld [vmem:[%s5 + $0x28] sm:$0xf]
        %v829 = vld [vmem:[%s5 + $0x2c] sm:$0xf]
        %v830 = vld [vmem:[%s5 + $0x30] sm:$0xf]
        %v831 = vld [vmem:[%s5 + $0x34] sm:$0xf]
        %v832 = vld [vmem:[%s5 + $0x38] sm:$0xf]
        %v833 = vld [vmem:[%s5 + $0x3c] sm:$0xf]
        %v834 = vld [vmem:[%s6] sm:$0x1]
        %v836 = vperm.slane %v834, 0
        %v854 = vunpack.c.l.b16 %v818
        %v855 = vunpack.c.l.b16 %v819
        %v856 = vunpack.c.l.b16 %v820
        %v857 = vunpack.c.l.b16 %v821
        %v858 = vunpack.c.l.b16 %v822
        %v859 = vunpack.c.l.b16 %v823
        %v860 = vunpack.c.l.b16 %v824
        %v861 = vunpack.c.l.b16 %v825
        %v862 = vunpack.c.l.b16 %v826
        %v863 = vunpack.c.l.b16 %v827
        %v864 = vunpack.c.l.b16 %v828
        %v865 = vunpack.c.l.b16 %v829
        %v866 = vunpack.c.l.b16 %v830
        %v867 = vunpack.c.l.b16 %v831
        %v868 = vunpack.c.l.b16 %v832
        %v869 = vunpack.c.l.b16 %v833
        %v870 = vpack.c.b16 %v855, %v854
        %v871 = vpack.c.b16 %v857, %v856
        %v872 = vpack.c.b16 %v859, %v858
        %v873 = vpack.c.b16 %v861, %v860
        %v874 = vpack.c.b16 %v863, %v862
        %v875 = vpack.c.b16 %v865, %v864
        %v876 = vpack.c.b16 %v867, %v866
        %v877 = vpack.c.b16 %v869, %v868
        %886 = vmatpush.bf16.msra.mxu0 %v877
        %887 = vmatpush.bf16.msra.mxu0 %v876
        %888 = vmatpush.bf16.msra.mxu0 %v875
        %889 = vmatpush.bf16.msra.mxu0 %v874
        %890 = vmatpush.bf16.msra.mxu0 %v873
        %891 = vmatpush.bf16.msra.mxu0 %v872
        %892 = vmatpush.bf16.msra.mxu0 %v871
        %893 = vmatpush.bf16.msra.mxu0 %v870
        %894 = vmatmul.bf16.gmra.mxu0 %v802
        %v895 = vpop.f32.mrf.mxu0
        %v896 = vadd.f32 %v836, %v895
        %v897 = vpop.f32.mrf.mxu0
        %v898 = vadd.f32 %v836, %v897
        %899 = vmatmul.bf16.gmra.mxu0 %v803
        %v900 = vpop.f32.mrf.mxu0
        %v901 = vadd.f32 %v836, %v900
        %v902 = vpop.f32.mrf.mxu0
        %v903 = vadd.f32 %v836, %v902
        %904 = vmatmul.bf16.gmra.mxu0 %v804
        %v905 = vpop.f32.mrf.mxu0
        %v906 = vadd.f32 %v836, %v905
        %v907 = vpop.f32.mrf.mxu0
        %v908 = vadd.f32 %v836, %v907
        %909 = vmatmul.bf16.gmra.mxu0 %v805
        %v910 = vpop.f32.mrf.mxu0
        %v911 = vadd.f32 %v836, %v910
        %v912 = vpop.f32.mrf.mxu0
        %v913 = vadd.f32 %v836, %v912
        %914 = vmatmul.bf16.gmra.mxu0 %v806
        %v915 = vpop.f32.mrf.mxu0
        %v916 = vadd.f32 %v836, %v915
        %v917 = vpop.f32.mrf.mxu0
        %v918 = vadd.f32 %v836, %v917
        %919 = vmatmul.bf16.gmra.mxu0 %v807
        %v920 = vpop.f32.mrf.mxu0
        %v921 = vadd.f32 %v836, %v920
        %v922 = vpop.f32.mrf.mxu0
        %v923 = vadd.f32 %v836, %v922
        %924 = vmatmul.bf16.gmra.mxu0 %v808
        %v925 = vpop.f32.mrf.mxu0
        %v926 = vadd.f32 %v836, %v925
        %v927 = vpop.f32.mrf.mxu0
        %v928 = vadd.f32 %v836, %v927
        %929 = vmatmul.bf16.gmra.mxu0 %v809
        %v930 = vpop.f32.mrf.mxu0
        %v931 = vadd.f32 %v836, %v930
        %v932 = vpop.f32.mrf.mxu0
        %v933 = vadd.f32 %v836, %v932
        %934 = vmatmul.bf16.gmra.mxu0 %v810
        %v935 = vpop.f32.mrf.mxu0
        %v936 = vadd.f32 %v836, %v935
        %v937 = vpop.f32.mrf.mxu0
        %v938 = vadd.f32 %v836, %v937
        %939 = vmatmul.bf16.gmra.mxu0 %v811
        %v940 = vpop.f32.mrf.mxu0
        %v941 = vadd.f32 %v836, %v940
        %v942 = vpop.f32.mrf.mxu0
        %v943 = vadd.f32 %v836, %v942
        %944 = vmatmul.bf16.gmra.mxu0 %v812
        %v945 = vpop.f32.mrf.mxu0
        %v946 = vadd.f32 %v836, %v945
        %v947 = vpop.f32.mrf.mxu0
        %v948 = vadd.f32 %v836, %v947
        %949 = vmatmul.bf16.gmra.mxu0 %v813
        %v950 = vpop.f32.mrf.mxu0
        %v951 = vadd.f32 %v836, %v950
        %v952 = vpop.f32.mrf.mxu0
        %v953 = vadd.f32 %v836, %v952
        %954 = vmatmul.bf16.gmra.mxu0 %v814
        %v955 = vpop.f32.mrf.mxu0
        %v956 = vadd.f32 %v836, %v955
        %v957 = vpop.f32.mrf.mxu0
        %v958 = vadd.f32 %v836, %v957
        %959 = vmatmul.bf16.gmra.mxu0 %v815
        %v960 = vpop.f32.mrf.mxu0
        %v961 = vadd.f32 %v836, %v960
        %v962 = vpop.f32.mrf.mxu0
        %v963 = vadd.f32 %v836, %v962
        %964 = vmatmul.bf16.gmra.mxu0 %v816
        %v965 = vpop.f32.mrf.mxu0
        %v966 = vadd.f32 %v836, %v965
        %v967 = vpop.f32.mrf.mxu0
        %v968 = vadd.f32 %v836, %v967
        %969 = vmatmul.bf16.gmra.mxu0 %v817
        %v970 = vpop.f32.mrf.mxu0
        %v971 = vadd.f32 %v836, %v970
        %v972 = vpop.f32.mrf.mxu0
        %v973 = vadd.f32 %v836, %v972
        %974 = vdwg.mxu0
        %v975 = vmax.f32 %v896, 0.0
        %v976 = vmax.f32 %v898, 0.0
        %v977 = vmax.f32 %v901, 0.0
        %v978 = vmax.f32 %v903, 0.0
        %v979 = vmax.f32 %v906, 0.0
        %v980 = vmax.f32 %v908, 0.0
        %v981 = vmax.f32 %v911, 0.0
        %v982 = vmax.f32 %v913, 0.0
        %v983 = vmax.f32 %v916, 0.0
        %v984 = vmax.f32 %v918, 0.0
        %v985 = vmax.f32 %v921, 0.0
        %v986 = vmax.f32 %v923, 0.0
        %v987 = vmax.f32 %v926, 0.0
        %v988 = vmax.f32 %v928, 0.0
        %v989 = vmax.f32 %v931, 0.0
        %v990 = vmax.f32 %v933, 0.0
        %v991 = vmax.f32 %v936, 0.0
        %v992 = vmax.f32 %v938, 0.0
        %v993 = vmax.f32 %v941, 0.0
        %v994 = vmax.f32 %v943, 0.0
        %v995 = vmax.f32 %v946, 0.0
        %v996 = vmax.f32 %v948, 0.0
        %v997 = vmax.f32 %v951, 0.0
        %v998 = vmax.f32 %v953, 0.0
        %v999 = vmax.f32 %v956, 0.0
        %v1000 = vmax.f32 %v958, 0.0
        %v1001 = vmax.f32 %v961, 0.0
        %v1002 = vmax.f32 %v963, 0.0
        %v1003 = vmax.f32 %v966, 0.0
        %v1004 = vmax.f32 %v968, 0.0
        %v1005 = vmax.f32 %v971, 0.0
        %v1006 = vmax.f32 %v973, 0.0
        %v1007 = vpack.c.bf16 %v976, %v975
        %v1008 = vpack.c.bf16 %v978, %v977
        %v1009 = vpack.c.bf16 %v980, %v979
        %v1010 = vpack.c.bf16 %v982, %v981
        %v1011 = vpack.c.bf16 %v984, %v983
        %v1012 = vpack.c.bf16 %v986, %v985
        %v1013 = vpack.c.bf16 %v988, %v987
        %v1014 = vpack.c.bf16 %v990, %v989
        %v1015 = vpack.c.bf16 %v992, %v991
        %v1016 = vpack.c.bf16 %v994, %v993
        %v1017 = vpack.c.bf16 %v996, %v995
        %v1018 = vpack.c.bf16 %v998, %v997
        %v1019 = vpack.c.bf16 %v1000, %v999
        %v1020 = vpack.c.bf16 %v1002, %v1001
        %v1021 = vpack.c.bf16 %v1004, %v1003
        %v1022 = vpack.c.bf16 %v1006, %v1005
        %v1023 = vld [vmem:[%s7] sm:$0xf]
        %v1024 = vld [vmem:[%s7 + $0x4] sm:$0xf]
        %v1025 = vld [vmem:[%s7 + $0x8] sm:$0xf]
        %v1026 = vld [vmem:[%s7 + $0xc] sm:$0xf]
        %v1027 = vld [vmem:[%s7 + $0x10] sm:$0xf]
        %v1028 = vld [vmem:[%s7 + $0x14] sm:$0xf]
        %v1029 = vld [vmem:[%s7 + $0x18] sm:$0xf]
        %v1030 = vld [vmem:[%s7 + $0x1c] sm:$0xf]
        %v1031 = vld [vmem:[%s7 + $0x20] sm:$0xf]
        %v1032 = vld [vmem:[%s7 + $0x24] sm:$0xf]
        %v1033 = vld [vmem:[%s7 + $0x28] sm:$0xf]
        %v1034 = vld [vmem:[%s7 + $0x2c] sm:$0xf]
        %v1035 = vld [vmem:[%s7 + $0x30] sm:$0xf]
        %v1036 = vld [vmem:[%s7 + $0x34] sm:$0xf]
        %v1037 = vld [vmem:[%s7 + $0x38] sm:$0xf]
        %v1038 = vld [vmem:[%s7 + $0x3c] sm:$0xf]
        %v1039 = vld [vmem:[%s8] sm:$0x1]
        %v1041 = vperm.slane %v1039, 0
        %v1059 = vunpack.c.l.b16 %v1023
        %v1060 = vunpack.c.l.b16 %v1024
        %v1061 = vunpack.c.l.b16 %v1025
        %v1062 = vunpack.c.l.b16 %v1026
        %v1063 = vunpack.c.l.b16 %v1027
        %v1064 = vunpack.c.l.b16 %v1028
        %v1065 = vunpack.c.l.b16 %v1029
        %v1066 = vunpack.c.l.b16 %v1030
        %v1067 = vunpack.c.l.b16 %v1031
        %v1068 = vunpack.c.l.b16 %v1032
        %v1069 = vunpack.c.l.b16 %v1033
        %v1070 = vunpack.c.l.b16 %v1034
        %v1071 = vunpack.c.l.b16 %v1035
        %v1072 = vunpack.c.l.b16 %v1036
        %v1073 = vunpack.c.l.b16 %v1037
        %v1074 = vunpack.c.l.b16 %v1038
        %v1075 = vpack.c.b16 %v1060, %v1059
        %v1076 = vpack.c.b16 %v1062, %v1061
        %v1077 = vpack.c.b16 %v1064, %v1063
        %v1078 = vpack.c.b16 %v1066, %v1065
        %v1079 = vpack.c.b16 %v1068, %v1067
        %v1080 = vpack.c.b16 %v1070, %v1069
        %v1081 = vpack.c.b16 %v1072, %v1071
        %v1082 = vpack.c.b16 %v1074, %v1073
        %1091 = vmatpush.bf16.msra.mxu0 %v1082
        %1092 = vmatpush.bf16.msra.mxu0 %v1081
        %1093 = vmatpush.bf16.msra.mxu0 %v1080
        %1094 = vmatpush.bf16.msra.mxu0 %v1079
        %1095 = vmatpush.bf16.msra.mxu0 %v1078
        %1096 = vmatpush.bf16.msra.mxu0 %v1077
        %1097 = vmatpush.bf16.msra.mxu0 %v1076
        %1098 = vmatpush.bf16.msra.mxu0 %v1075
        %1099 = vmatmul.bf16.gmra.mxu0 %v1007
        %v1100 = vpop.f32.mrf.mxu0
        %v1101 = vadd.f32 %v1041, %v1100
        %v1102 = vpop.f32.mrf.mxu0
        %v1103 = vadd.f32 %v1041, %v1102
        %1104 = vmatmul.bf16.gmra.mxu0 %v1008
        %v1105 = vpop.f32.mrf.mxu0
        %v1106 = vadd.f32 %v1041, %v1105
        %v1107 = vpop.f32.mrf.mxu0
        %v1108 = vadd.f32 %v1041, %v1107
        %1109 = vmatmul.bf16.gmra.mxu0 %v1009
        %v1110 = vpop.f32.mrf.mxu0
        %v1111 = vadd.f32 %v1041, %v1110
        %v1112 = vpop.f32.mrf.mxu0
        %v1113 = vadd.f32 %v1041, %v1112
        %1114 = vmatmul.bf16.gmra.mxu0 %v1010
        %v1115 = vpop.f32.mrf.mxu0
        %v1116 = vadd.f32 %v1041, %v1115
        %v1117 = vpop.f32.mrf.mxu0
        %v1118 = vadd.f32 %v1041, %v1117
        %1119 = vmatmul.bf16.gmra.mxu0 %v1011
        %v1120 = vpop.f32.mrf.mxu0
        %v1121 = vadd.f32 %v1041, %v1120
        %v1122 = vpop.f32.mrf.mxu0
        %v1123 = vadd.f32 %v1041, %v1122
        %1124 = vmatmul.bf16.gmra.mxu0 %v1012
        %v1125 = vpop.f32.mrf.mxu0
        %v1126 = vadd.f32 %v1041, %v1125
        %v1127 = vpop.f32.mrf.mxu0
        %v1128 = vadd.f32 %v1041, %v1127
        %1129 = vmatmul.bf16.gmra.mxu0 %v1013
        %v1130 = vpop.f32.mrf.mxu0
        %v1131 = vadd.f32 %v1041, %v1130
        %v1132 = vpop.f32.mrf.mxu0
        %v1133 = vadd.f32 %v1041, %v1132
        %1134 = vmatmul.bf16.gmra.mxu0 %v1014
        %v1135 = vpop.f32.mrf.mxu0
        %v1136 = vadd.f32 %v1041, %v1135
        %v1137 = vpop.f32.mrf.mxu0
        %v1138 = vadd.f32 %v1041, %v1137
        %1139 = vmatmul.bf16.gmra.mxu0 %v1015
        %v1140 = vpop.f32.mrf.mxu0
        %v1141 = vadd.f32 %v1041, %v1140
        %v1142 = vpop.f32.mrf.mxu0
        %v1143 = vadd.f32 %v1041, %v1142
        %1144 = vmatmul.bf16.gmra.mxu0 %v1016
        %v1145 = vpop.f32.mrf.mxu0
        %v1146 = vadd.f32 %v1041, %v1145
        %v1147 = vpop.f32.mrf.mxu0
        %v1148 = vadd.f32 %v1041, %v1147
        %1149 = vmatmul.bf16.gmra.mxu0 %v1017
        %v1150 = vpop.f32.mrf.mxu0
        %v1151 = vadd.f32 %v1041, %v1150
        %v1152 = vpop.f32.mrf.mxu0
        %v1153 = vadd.f32 %v1041, %v1152
        %1154 = vmatmul.bf16.gmra.mxu0 %v1018
        %v1155 = vpop.f32.mrf.mxu0
        %v1156 = vadd.f32 %v1041, %v1155
        %v1157 = vpop.f32.mrf.mxu0
        %v1158 = vadd.f32 %v1041, %v1157
        %1159 = vmatmul.bf16.gmra.mxu0 %v1019
        %v1160 = vpop.f32.mrf.mxu0
        %v1161 = vadd.f32 %v1041, %v1160
        %v1162 = vpop.f32.mrf.mxu0
        %v1163 = vadd.f32 %v1041, %v1162
        %1164 = vmatmul.bf16.gmra.mxu0 %v1020
        %v1165 = vpop.f32.mrf.mxu0
        %v1166 = vadd.f32 %v1041, %v1165
        %v1167 = vpop.f32.mrf.mxu0
        %v1168 = vadd.f32 %v1041, %v1167
        %1169 = vmatmul.bf16.gmra.mxu0 %v1021
        %v1170 = vpop.f32.mrf.mxu0
        %v1171 = vadd.f32 %v1041, %v1170
        %v1172 = vpop.f32.mrf.mxu0
        %v1173 = vadd.f32 %v1041, %v1172
        %1174 = vmatmul.bf16.gmra.mxu0 %v1022
        %v1175 = vpop.f32.mrf.mxu0
        %v1176 = vadd.f32 %v1041, %v1175
        %v1177 = vpop.f32.mrf.mxu0
        %v1178 = vadd.f32 %v1041, %v1177
        %1179 = vdwg.mxu0
        %v1180 = vpack.c.bf16 %v1101, %v1101
        %v1181 = vpack.c.bf16 %v1103, %v1103
        %v1182 = vpack.c.bf16 %v1106, %v1106
        %v1183 = vpack.c.bf16 %v1108, %v1108
        %v1184 = vpack.c.bf16 %v1111, %v1111
        %v1185 = vpack.c.bf16 %v1113, %v1113
        %v1186 = vpack.c.bf16 %v1116, %v1116
        %v1187 = vpack.c.bf16 %v1118, %v1118
        %v1188 = vpack.c.bf16 %v1121, %v1121
        %v1189 = vpack.c.bf16 %v1123, %v1123
        %v1190 = vpack.c.bf16 %v1126, %v1126
        %v1191 = vpack.c.bf16 %v1128, %v1128
        %v1192 = vpack.c.bf16 %v1131, %v1131
        %v1193 = vpack.c.bf16 %v1133, %v1133
        %v1194 = vpack.c.bf16 %v1136, %v1136
        %v1195 = vpack.c.bf16 %v1138, %v1138
        %v1196 = vpack.c.bf16 %v1141, %v1141
        %v1197 = vpack.c.bf16 %v1143, %v1143
        %v1198 = vpack.c.bf16 %v1146, %v1146
        %v1199 = vpack.c.bf16 %v1148, %v1148
        %v1200 = vpack.c.bf16 %v1151, %v1151
        %v1201 = vpack.c.bf16 %v1153, %v1153
        %v1202 = vpack.c.bf16 %v1156, %v1156
        %v1203 = vpack.c.bf16 %v1158, %v1158
        %v1204 = vpack.c.bf16 %v1161, %v1161
        %v1205 = vpack.c.bf16 %v1163, %v1163
        %v1206 = vpack.c.bf16 %v1166, %v1166
        %v1207 = vpack.c.bf16 %v1168, %v1168
        %v1208 = vpack.c.bf16 %v1171, %v1171
        %v1209 = vpack.c.bf16 %v1173, %v1173
        %v1210 = vpack.c.bf16 %v1176, %v1176
        %v1211 = vpack.c.bf16 %v1178, %v1178
        %1212 = vst [vmem:[%s338] sm:$0xf] %v1180
        %1213 = vst [vmem:[%s338 + $0x4] sm:$0xf] %v1181
        %1214 = vst [vmem:[%s338 + $0x8] sm:$0xf] %v1182
        %1215 = vst [vmem:[%s338 + $0xc] sm:$0xf] %v1183
        %1216 = vst [vmem:[%s338 + $0x10] sm:$0xf] %v1184
        %1217 = vst [vmem:[%s338 + $0x14] sm:$0xf] %v1185
        %1218 = vst [vmem:[%s338 + $0x18] sm:$0xf] %v1186
        %1219 = vst [vmem:[%s338 + $0x1c] sm:$0xf] %v1187
        %1220 = vst [vmem:[%s338 + $0x20] sm:$0xf] %v1188
        %1221 = vst [vmem:[%s338 + $0x24] sm:$0xf] %v1189
        %1222 = vst [vmem:[%s338 + $0x28] sm:$0xf] %v1190
        %1223 = vst [vmem:[%s338 + $0x2c] sm:$0xf] %v1191
        %1224 = vst [vmem:[%s338 + $0x30] sm:$0xf] %v1192
        %1225 = vst [vmem:[%s338 + $0x34] sm:$0xf] %v1193
        %1226 = vst [vmem:[%s338 + $0x38] sm:$0xf] %v1194
        %1227 = vst [vmem:[%s338 + $0x3c] sm:$0xf] %v1195
        %1228 = vst [vmem:[%s338 + $0x40] sm:$0xf] %v1196
        %1229 = vst [vmem:[%s338 + $0x44] sm:$0xf] %v1197
        %1230 = vst [vmem:[%s338 + $0x48] sm:$0xf] %v1198
        %1231 = vst [vmem:[%s338 + $0x4c] sm:$0xf] %v1199
        %1232 = vst [vmem:[%s338 + $0x50] sm:$0xf] %v1200
        %1233 = vst [vmem:[%s338 + $0x54] sm:$0xf] %v1201
        %1234 = vst [vmem:[%s338 + $0x58] sm:$0xf] %v1202
        %1235 = vst [vmem:[%s338 + $0x5c] sm:$0xf] %v1203
        %1236 = vst [vmem:[%s338 + $0x60] sm:$0xf] %v1204
        %1237 = vst [vmem:[%s338 + $0x64] sm:$0xf] %v1205
        %1238 = vst [vmem:[%s338 + $0x68] sm:$0xf] %v1206
        %1239 = vst [vmem:[%s338 + $0x6c] sm:$0xf] %v1207
        %1240 = vst [vmem:[%s338 + $0x70] sm:$0xf] %v1208
        %1241 = vst [vmem:[%s338 + $0x74] sm:$0xf] %v1209
        %1242 = vst [vmem:[%s338 + $0x78] sm:$0xf] %v1210
        %1243 = vst [vmem:[%s338 + $0x7c] sm:$0xf] %v1211
        %s1244 = sand.u32 %s225, 1
        %s1245 = scalar_lea.sflag [#allocation3], %s1244
        %s1246 = sand.u32 %s225, 1
        %s1247 = smul.addr %s1246, 128
        %s1248 = scalar_lea.vmem [#allocation2], %s1247
        // Predicated region
        $region57: #{tpu_custom_call.1} parent=55 // pred_check
          %p1249 = pneg %p235
        $region58: #{tpu_custom_call.1} parent=55 // pred_check_branch
          %1251 = sbr.rel (%p1249) target = $region60
        $region59: #{tpu_custom_call.1} parent=55 // pred_region
          %s1252 = smul.u32 32, %s23
          %s1253 = ssub.s32 63, %s1252
          %p1254 = scmp.lt.s32.totalorder %s1253, 32
          %s1255 = scalar_select %p1254, %s1253, 32
          %s1256 = smul.u32 4, %s1255
          %s1257 = ssub.s32 128, %s1256
          %s1258 = sshll.u32 %s1257, 4
          %1259 = vsyncadd %s1245, %s1258
          %p1260 = scmp.ne.s32.totalorder 0, %s1256
          %s1261 = smul.addr %s1252, 4
          %s1262 = scalar_lea.hbm %s9, %s1261
          %s1263 = smul.u32 4, %s1255
          %s1264 = sshll.u32 %s1248, 4
          %s1265 = int_to_ptr.vmem [resolvable:$true] %s1264
          %s1266 = sshll.u32 %s1262, 4
          %s1267 = int_to_ptr.hbm [resolvable:$true] %s1266
          %s1268 = sshll.u32 %s1263, 4
          %1272 = dma.vmem_to_hbm [thread:$0]  (%p1260), %s1265, %s1268, %s1267, %s1245, 64, 64, 4
        $region60: #{tpu_custom_call.1} parent=55 // pred_fallthru
          _
      $region56: #{tpu_custom_call.1} parent=5 // pred_fallthru
        _
      %p1273 = scmp.le.s32.totalorder 2, %s18
      // Predicated region
      $region61: #{tpu_custom_call.1} parent=5 // pred_check
        %p1274 = pneg %p1273
      $region62: #{tpu_custom_call.1} parent=5 // pred_check_branch
        %1276 = sbr.rel (%p1274) target = $region64
      $region63: #{tpu_custom_call.1} parent=5 // pred_region
        %s1277 = ssub.s32 %s18, 2
        // Predicated region
        $region65: #{tpu_custom_call.1} parent=63 // pred_check
          %p1278 = pneg %p241
        $region66: #{tpu_custom_call.1} parent=63 // pred_check_branch
          %1280 = sbr.rel (%p1278) target = $region68
        $region67: #{tpu_custom_call.1} parent=63 // pred_region
          %s1281 = sand.u32 %s226, 1
          %s1282 = scalar_lea.sflag [#allocation3], %s1281
          %s1283 = sand.u32 %s226, 1
          %s1284 = smul.addr %s1283, 128
          %s1285 = scalar_lea.vmem [#allocation2], %s1284
          %1287 = dma.done %s1282, 2048
        $region68: #{tpu_custom_call.1} parent=63 // pred_fallthru
          _
      $region64: #{tpu_custom_call.1} parent=5 // pred_fallthru
        _
    $region6: #{tpu_custom_call.1} parent=1 // loop_footer
      %s22 = sadd.s32 1, %s18
    $region7: #{tpu_custom_call.1} parent=1 // loop_footer_branch
      %17 = sbr.rel target = $region3
    $region8: #{tpu_custom_call.1} parent=1 // loop_exit
      _
    %1288 = vsyncpa [#allocation3], 1
    %s1289 = scalar_lea.sflag [#allocation3], 1
    %1290 = vsyncpa %s1289, 1

// kernel: tpu_custom_call.1
$region0: #{tpu_custom_call.1}
  #allocation0 [shape = 'u32[]', space=smem, size = 0x4, offset = 0x4, fixed_abs, tag = 'smem constant byte address 0x4 - core index']
  #allocation1 [shape = 'u32[72,128]{1,0:T(1,128)}', space=vmem, size = 0x9000, scoped, tag = 'internal scratch']
  %s0 = inlined_call_operand.vmem [shape: f32[500,32], index: 0, kind: input, shape index: {}]
  %s1 = inlined_call_operand.vmem [shape: bf16[32,128], index: 1, kind: input, shape index: {}]
  %s2 = inlined_call_operand.vmem [shape: f32[1,128], index: 2, kind: input, shape index: {}]
  %s3 = inlined_call_operand.vmem [shape: bf16[128,128], index: 3, kind: input, shape index: {}]
  %s4 = inlined_call_operand.vmem [shape: f32[1,128], index: 4, kind: input, shape index: {}]
  %s5 = inlined_call_operand.vmem [shape: bf16[128,128], index: 5, kind: input, shape index: {}]
  %s6 = inlined_call_operand.vmem [shape: f32[1,128], index: 6, kind: input, shape index: {}]
  %s7 = inlined_call_operand.vmem [shape: bf16[128,128], index: 7, kind: input, shape index: {}]
  %s8 = inlined_call_operand.vmem [shape: f32[1,128], index: 8, kind: input, shape index: {}]
  %s9 = inlined_call_operand.hbm [shape: bf16[500,128], index: 9, kind: output, shape index: {}]
  %s10 = sld [smem:[#allocation0]]
  $region69: #{tpu_custom_call.1} parent=0
    _
  %s12 = ssub.s32 1, %s10
  %s13 = scalar_select 0, %s12, %s10
  $region1: #{tpu_custom_call.1} parent=0
    #allocation2 [shape = 'u8[131072]{0}', space=vmem, size = 0x20000, scoped, tag = 'output window, operand 0']
    #allocation3 [shape = 's32[2]{0}', space=sflag, size = 0x8, scoped, tag = 'scoped memory for tpu_custom_call.1']
    %14 = vsyncpa [#allocation3], 0
    %s15 = scalar_lea.sflag [#allocation3], 1
    %16 = vsyncpa %s15, 0
    loop: start=0, step=1, limit=4
    $region2: #{tpu_custom_call.1} parent=1 // loop_pre_header
      _
    $region3: #{tpu_custom_call.1} parent=1 // loop_header
      %s18 = sphi 0, %s22
      %p19 = scmp.ge.s32.totalorder %s18, 4
      %s28 = sphi 0, %s30
      %s31 = sphi 0, %s28
      %s32 = sphi 0, %s31
      %s48 = sphi 0, %s32
      %s52 = sphi 0, %s52
      %s54 = sphi 0, %s52
      %s55 = sphi 0, %s54
      %s69 = sphi 0, %s55
      %s73 = sphi 0, %s73
      %s75 = sphi 0, %s73
      %s76 = sphi 0, %s75
      %s90 = sphi 0, %s76
      %s94 = sphi 0, %s94
      %s96 = sphi 0, %s94
      %s97 = sphi 0, %s96
      %s111 = sphi 0, %s97
      %s115 = sphi 0, %s115
      %s117 = sphi 0, %s115
      %s118 = sphi 0, %s117
      %s132 = sphi 0, %s118
      %s136 = sphi 0, %s136
      %s138 = sphi 0, %s136
      %s139 = sphi 0, %s138
      %s153 = sphi 0, %s139
      %s157 = sphi 0, %s157
      %s159 = sphi 0, %s157
      %s160 = sphi 0, %s159
      %s174 = sphi 0, %s160
      %s178 = sphi 0, %s178
      %s180 = sphi 0, %s178
      %s181 = sphi 0, %s180
      %s195 = sphi 0, %s181
      %s199 = sphi 0, %s199
      %s201 = sphi 0, %s199
      %s202 = sphi 0, %s201
      %s216 = sphi 0, %s202
      %s222 = sphi 0, %s224
      %s225 = sphi 0, %s222
      %s226 = sphi 0, %s225
      %s242 = sphi 0, %s226
    $region4: #{tpu_custom_call.1} parent=1 // loop_header_branch
      %21 = sbr.rel (%p19) target = $region8
    $region5: #{tpu_custom_call.1} parent=1 // loop_body
      %s23 = ssub.s32 %s18, 1
      %s24 = ssub.s32 %s18, 2
      %s25 = sadd.s32 %s18, 1
      %s26 = ssub.s32 %s18, %s25
      %p27 = scmp.eq.s32.totalorder %s26, 0
      %s29 = sadd.s32 %s28, 1
      %s30 = scalar_select %p27, %s28, %s29
      %p33 = pneg %p27
      %p34 = scmp.eq.s32.totalorder %s18, 1
      %p35 = por %p33, %p34
      %p36 = scmp.ne.s32.totalorder %s28, %s31
      %p37 = scmp.eq.s32.totalorder %s18, 0
      %p38 = por %p36, %p37
      %p39 = scmp.ne.s32.totalorder %s28, %s31
      %p40 = scmp.eq.s32.totalorder %s23, 1
      %p41 = por %p39, %p40
      %p42 = scmp.ne.s32.totalorder %s31, %s32
      %p43 = scmp.eq.s32.totalorder %s23, 0
      %p44 = por %p42, %p43
      %p45 = scmp.ne.s32.totalorder %s31, %s32
      %p46 = scmp.eq.s32.totalorder %s24, 1
      %p47 = por %p45, %p46
      %p49 = scmp.ne.s32.totalorder %s32, %s48
      %p50 = scmp.eq.s32.totalorder %s24, 0
      %p51 = por %p49, %p50
      %s53 = sadd.s32 %s52, 1
      %p56 = scmp.eq.s32.totalorder %s18, 1
      %p57 = scmp.ne.s32.totalorder %s52, %s54
      %p58 = scmp.eq.s32.totalorder %s18, 0
      %p59 = por %p57, %p58
      %p60 = scmp.ne.s32.totalorder %s52, %s54
      %p61 = scmp.eq.s32.totalorder %s23, 1
      %p62 = por %p60, %p61
      %p63 = scmp.ne.s32.totalorder %s54, %s55
      %p64 = scmp.eq.s32.totalorder %s23, 0
      %p65 = por %p63, %p64
      %p66 = scmp.ne.s32.totalorder %s54, %s55
      %p67 = scmp.eq.s32.totalorder %s24, 1
      %p68 = por %p66, %p67
      %p70 = scmp.ne.s32.totalorder %s55, %s69
      %p71 = scmp.eq.s32.totalorder %s24, 0
      %p72 = por %p70, %p71
      %s74 = sadd.s32 %s73, 1
      %p77 = scmp.eq.s32.totalorder %s18, 1
      %p78 = scmp.ne.s32.totalorder %s73, %s75
      %p79 = scmp.eq.s32.totalorder %s18, 0
      %p80 = por %p78, %p79
      %p81 = scmp.ne.s32.totalorder %s73, %s75
      %p82 = scmp.eq.s32.totalorder %s23, 1
      %p83 = por %p81, %p82
      %p84 = scmp.ne.s32.totalorder %s75, %s76
      %p85 = scmp.eq.s32.totalorder %s23, 0
      %p86 = por %p84, %p85
      %p87 = scmp.ne.s32.totalorder %s75, %s76
      %p88 = scmp.eq.s32.totalorder %s24, 1
      %p89 = por %p87, %p88
      %p91 = scmp.ne.s32.totalorder %s76, %s90
      %p92 = scmp.eq.s32.totalorder %s24, 0
      %p93 = por %p91, %p92
      %s95 = sadd.s32 %s94, 1
      %p98 = scmp.eq.s32.totalorder %s18, 1
      %p99 = scmp.ne.s32.totalorder %s94, %s96
      %p100 = scmp.eq.s32.totalorder %s18, 0
      %p101 = por %p99, %p100
      %p102 = scmp.ne.s32.totalorder %s94, %s96
      %p103 = scmp.eq.s32.totalorder %s23, 1
      %p104 = por %p102, %p103
      %p105 = scmp.ne.s32.totalorder %s96, %s97
      %p106 = scmp.eq.s32.totalorder %s23, 0
      %p107 = por %p105, %p106
      %p108 = scmp.ne.s32.totalorder %s96, %s97
      %p109 = scmp.eq.s32.totalorder %s24, 1
      %p110 = por %p108, %p109
      %p112 = scmp.ne.s32.totalorder %s97, %s111
      %p113 = scmp.eq.s32.totalorder %s24, 0
      %p114 = por %p112, %p113
      %s116 = sadd.s32 %s115, 1
      %p119 = scmp.eq.s32.totalorder %s18, 1
      %p120 = scmp.ne.s32.totalorder %s115, %s117
      %p121 = scmp.eq.s32.totalorder %s18, 0
      %p122 = por %p120, %p121
      %p123 = scmp.ne.s32.totalorder %s115, %s117
      %p124 = scmp.eq.s32.totalorder %s23, 1
      %p125 = por %p123, %p124
      %p126 = scmp.ne.s32.totalorder %s117, %s118
      %p127 = scmp.eq.s32.totalorder %s23, 0
      %p128 = por %p126, %p127
      %p129 = scmp.ne.s32.totalorder %s117, %s118
      %p130 = scmp.eq.s32.totalorder %s24, 1
      %p131 = por %p129, %p130
      %p133 = scmp.ne.s32.totalorder %s118, %s132
      %p134 = scmp.eq.s32.totalorder %s24, 0
      %p135 = por %p133, %p134
      %s137 = sadd.s32 %s136, 1
      %p140 = scmp.eq.s32.totalorder %s18, 1
      %p141 = scmp.ne.s32.totalorder %s136, %s138
      %p142 = scmp.eq.s32.totalorder %s18, 0
      %p143 = por %p141, %p142
      %p144 = scmp.ne.s32.totalorder %s136, %s138
      %p145 = scmp.eq.s32.totalorder %s23, 1
      %p146 = por %p144, %p145
      %p147 = scmp.ne.s32.totalorder %s138, %s139
      %p148 = scmp.eq.s32.totalorder %s23, 0
      %p149 = por %p147, %p148
      %p150 = scmp.ne.s32.totalorder %s138, %s139
      %p151 = scmp.eq.s32.totalorder %s24, 1
      %p152 = por %p150, %p151
      %p154 = scmp.ne.s32.totalorder %s139, %s153
      %p155 = scmp.eq.s32.totalorder %s24, 0
      %p156 = por %p154, %p155
      %s158 = sadd.s32 %s157, 1
      %p161 = scmp.eq.s32.totalorder %s18, 1
      %p162 = scmp.ne.s32.totalorder %s157, %s159
      %p163 = scmp.eq.s32.totalorder %s18, 0
      %p164 = por %p162, %p163
      %p165 = scmp.ne.s32.totalorder %s157, %s159
      %p166 = scmp.eq.s32.totalorder %s23, 1
      %p167 = por %p165, %p166
      %p168 = scmp.ne.s32.totalorder %s159, %s160
      %p169 = scmp.eq.s32.totalorder %s23, 0
      %p170 = por %p168, %p169
      %p171 = scmp.ne.s32.totalorder %s159, %s160
      %p172 = scmp.eq.s32.totalorder %s24, 1
      %p173 = por %p171, %p172
      %p175 = scmp.ne.s32.totalorder %s160, %s174
      %p176 = scmp.eq.s32.totalorder %s24, 0
      %p177 = por %p175, %p176
      %s179 = sadd.s32 %s178, 1
      %p182 = scmp.eq.s32.totalorder %s18, 1
      %p183 = scmp.ne.s32.totalorder %s178, %s180
      %p184 = scmp.eq.s32.totalorder %s18, 0
      %p185 = por %p183, %p184
      %p186 = scmp.ne.s32.totalorder %s178, %s180
      %p187 = scmp.eq.s32.totalorder %s23, 1
      %p188 = por %p186, %p187
      %p189 = scmp.ne.s32.totalorder %s180, %s181
      %p190 = scmp.eq.s32.totalorder %s23, 0
      %p191 = por %p189, %p190
      %p192 = scmp.ne.s32.totalorder %s180, %s181
      %p193 = scmp.eq.s32.totalorder %s24, 1
      %p194 = por %p192, %p193
      %p196 = scmp.ne.s32.totalorder %s181, %s195
      %p197 = scmp.eq.s32.totalorder %s24, 0
      %p198 = por %p196, %p197
      %s200 = sadd.s32 %s199, 1
      %p203 = scmp.eq.s32.totalorder %s18, 1
      %p204 = scmp.ne.s32.totalorder %s199, %s201
      %p205 = scmp.eq.s32.totalorder %s18, 0
      %p206 = por %p204, %p205
      %p207 = scmp.ne.s32.totalorder %s199, %s201
      %p208 = scmp.eq.s32.totalorder %s23, 1
      %p209 = por %p207, %p208
      %p210 = scmp.ne.s32.totalorder %s201, %s202
      %p211 = scmp.eq.s32.totalorder %s23, 0
      %p212 = por %p210, %p211
      %p213 = scmp.ne.s32.totalorder %s201, %s202
      %p214 = scmp.eq.s32.totalorder %s24, 1
      %p215 = por %p213, %p214
      %p217 = scmp.ne.s32.totalorder %s202, %s216
      %p218 = scmp.eq.s32.totalorder %s24, 0
      %p219 = por %p217, %p218
      %s220 = ssub.s32 %s18, %s25
      %p221 = scmp.eq.s32.totalorder %s220, 0
      %s223 = sadd.s32 %s222, 1
      %s224 = scalar_select %p221, %s222, %s223
      %p227 = pneg %p221
      %p228 = scmp.eq.s32.totalorder %s18, 1
      %p229 = por %p227, %p228
      %p230 = scmp.ne.s32.totalorder %s222, %s225
      %p231 = scmp.eq.s32.totalorder %s18, 0
      %p232 = por %p230, %p231
      %p233 = scmp.ne.s32.totalorder %s222, %s225
      %p234 = scmp.eq.s32.totalorder %s23, 1
      %p235 = por %p233, %p234
      %p236 = scmp.ne.s32.totalorder %s225, %s226
      %p237 = scmp.eq.s32.totalorder %s23, 0
      %p238 = por %p236, %p237
      %p239 = scmp.ne.s32.totalorder %s225, %s226
      %p240 = scmp.eq.s32.totalorder %s24, 1
      %p241 = por %p239, %p240
      %p243 = scmp.ne.s32.totalorder %s226, %s242
      %p244 = scmp.eq.s32.totalorder %s24, 0
      %p245 = por %p243, %p244
      %p246 = scmp.le.s32.totalorder 1, %s18
      %p247 = scmp.lt.s32.totalorder %s18, 3
      %p248 = pnand %p246, %p247
      %p249 = pneg %p248
      // Predicated region
      $region9: #{tpu_custom_call.1} parent=5 // pred_check
        _
      $region10: #{tpu_custom_call.1} parent=5 // pred_check_branch
        %251 = sbr.rel (%p248) target = $region12
      $region11: #{tpu_custom_call.1} parent=5 // pred_region
        %s252 = ssub.s32 %s18, 1
        // Predicated region
        $region13: #{tpu_custom_call.1} parent=11 // pred_check
          %p253 = pneg %p65
        $region14: #{tpu_custom_call.1} parent=11 // pred_check_branch
          %255 = sbr.rel (%p253) target = $region16
        $region15: #{tpu_custom_call.1} parent=11 // pred_region
          _
        $region16: #{tpu_custom_call.1} parent=11 // pred_fallthru
          _
        // Predicated region
        $region17: #{tpu_custom_call.1} parent=11 // pred_check
          %p256 = pneg %p86
        $region18: #{tpu_custom_call.1} parent=11 // pred_check_branch
          %258 = sbr.rel (%p256) target = $region20
        $region19: #{tpu_custom_call.1} parent=11 // pred_region
          _
        $region20: #{tpu_custom_call.1} parent=11 // pred_fallthru
          _
        // Predicated region
        $region21: #{tpu_custom_call.1} parent=11 // pred_check
          %p259 = pneg %p107
        $region22: #{tpu_custom_call.1} parent=11 // pred_check_branch
          %261 = sbr.rel (%p259) target = $region24
        $region23: #{tpu_custom_call.1} parent=11 // pred_region
          _
        $region24: #{tpu_custom_call.1} parent=11 // pred_fallthru
          _
        // Predicated region
        $region25: #{tpu_custom_call.1} parent=11 // pred_check
          %p262 = pneg %p128
        $region26: #{tpu_custom_call.1} parent=11 // pred_check_branch
          %264 = sbr.rel (%p262) target = $region28
        $region27: #{tpu_custom_call.1} parent=11 // pred_region
          _
        $region28: #{tpu_custom_call.1} parent=11 // pred_fallthru
          _
        // Predicated region
        $region29: #{tpu_custom_call.1} parent=11 // pred_check
          %p265 = pneg %p149
        $region30: #{tpu_custom_call.1} parent=11 // pred_check_branch
          %267 = sbr.rel (%p265) target = $region32
        $region31: #{tpu_custom_call.1} parent=11 // pred_region
          _
        $region32: #{tpu_custom_call.1} parent=11 // pred_fallthru
          _
        // Predicated region
        $region33: #{tpu_custom_call.1} parent=11 // pred_check
          %p268 = pneg %p170
        $region34: #{tpu_custom_call.1} parent=11 // pred_check_branch
          %270 = sbr.rel (%p268) target = $region36
        $region35: #{tpu_custom_call.1} parent=11 // pred_region
          _
        $region36: #{tpu_custom_call.1} parent=11 // pred_fallthru
          _
        // Predicated region
        $region37: #{tpu_custom_call.1} parent=11 // pred_check
          %p271 = pneg %p191
        $region38: #{tpu_custom_call.1} parent=11 // pred_check_branch
          %273 = sbr.rel (%p271) target = $region40
        $region39: #{tpu_custom_call.1} parent=11 // pred_region
          _
        $region40: #{tpu_custom_call.1} parent=11 // pred_fallthru
          _
        // Predicated region
        $region41: #{tpu_custom_call.1} parent=11 // pred_check
          %p274 = pneg %p212
        $region42: #{tpu_custom_call.1} parent=11 // pred_check_branch
          %276 = sbr.rel (%p274) target = $region44
        $region43: #{tpu_custom_call.1} parent=11 // pred_region
          _
        $region44: #{tpu_custom_call.1} parent=11 // pred_fallthru
          _
      $region12: #{tpu_custom_call.1} parent=5 // pred_fallthru
        _
      %p277 = scmp.lt.s32.totalorder %s18, 2
      // Predicated region
      $region45: #{tpu_custom_call.1} parent=5 // pred_check
        %p278 = pneg %p277
      $region46: #{tpu_custom_call.1} parent=5 // pred_check_branch
        %280 = sbr.rel (%p278) target = $region48
      $region47: #{tpu_custom_call.1} parent=5 // pred_region
        // Predicated region
        $region49: #{tpu_custom_call.1} parent=47 // pred_check
          %p281 = pneg %p38
        $region50: #{tpu_custom_call.1} parent=47 // pred_check_branch
          %283 = sbr.rel (%p281) target = $region52
        $region51: #{tpu_custom_call.1} parent=47 // pred_region
          %s284 = smul.u32 32, %s18
          %s285 = ssub.s32 63, %s284
          %p286 = scmp.lt.s32.totalorder %s285, 32
          %s287 = scalar_select %p286, %s285, 32
          %s288 = smul.u32 8, %s287
          %p289 = scmp.lt.s32.totalorder %s284, 62
          %s290 = scalar_select %p289, %s284, 62
          %s291 = smul.addr %s290, 8
          %s292 = scalar_lea.vmem %s0, %s291
          %s293 = smul.u32 32, %s18
          %s294 = ssub.s32 63, %s293
          %p295 = scmp.lt.s32.totalorder %s294, 32
          %s296 = scalar_select %p295, %s294, 32
          %s297 = smul.u32 8, %s296
        $region52: #{tpu_custom_call.1} parent=47 // pred_fallthru
          _
      $region48: #{tpu_custom_call.1} parent=5 // pred_fallthru
        _
      %p298 = scmp.le.s32.totalorder 1, %s18
      %p299 = scmp.lt.s32.totalorder %s18, 3
      %p300 = pnand %p298, %p299
      %p301 = pneg %p300
      // Predicated region
      $region53: #{tpu_custom_call.1} parent=5 // pred_check
        _
      $region54: #{tpu_custom_call.1} parent=5 // pred_check_branch
        %303 = sbr.rel (%p300) target = $region56
      $region55: #{tpu_custom_call.1} parent=5 // pred_region
        %s304 = ssub.s32 %s18, 1
        %s305 = smul.u32 32, %s23
        %s306 = ssub.s32 63, %s305
        %p307 = scmp.lt.s32.totalorder %s306, 32
        %s308 = scalar_select %p307, %s306, 32
        %s309 = smul.u32 8, %s308
        %p310 = scmp.lt.s32.totalorder %s305, 62
        %s311 = scalar_select %p310, %s305, 62
        %s312 = smul.addr %s311, 8
        %s313 = scalar_lea.vmem %s0, %s312
        %p314 = pneg %p44
        %p315 = pneg %p41
        %p316 = pneg %p65
        %p317 = pneg %p62
        %p318 = pneg %p86
        %p319 = pneg %p83
        %p320 = pneg %p107
        %p321 = pneg %p104
        %p322 = pneg %p128
        %p323 = pneg %p125
        %p324 = pneg %p149
        %p325 = pneg %p146
        %p326 = pneg %p170
        %p327 = pneg %p167
        %p328 = pneg %p191
        %p329 = pneg %p188
        %p330 = pneg %p212
        %p331 = pneg %p209
        %p332 = pneg %p238
        %p333 = pneg %p235
        %s334 = sand.u32 %s225, 1
        %s335 = scalar_lea.sflag [#allocation3], %s334
        %s336 = sand.u32 %s225, 1
        %s337 = smul.addr %s336, 128
        %s338 = scalar_lea.vmem [#allocation2], %s337
        %s339 = smul.u32 32, %s23
        %s340 = ssub.s32 63, %s339
        %p341 = scmp.lt.s32.totalorder %s340, 32
        %s342 = scalar_select %p341, %s340, 32
        %s343 = smul.u32 8, %s342
        %p344 = scmp.lt.s32.totalorder %s339, 62
        %s345 = scalar_select %p344, %s339, 62
        %s346 = smul.addr %s345, 8
        %s347 = scalar_lea.vmem %s0, %s346
        %s348 = smul.u32 32, %s23
        %s349 = ssub.s32 63, %s348
        %p350 = scmp.lt.s32.totalorder %s349, 32
        %s351 = scalar_select %p350, %s349, 32
        %s352 = smul.u32 8, %s351
        %s353 = smul.u32 32, %s23
        %s354 = ssub.s32 63, %s353
        %p355 = scmp.lt.s32.totalorder %s354, 32
        %s356 = scalar_select %p355, %s354, 32
        %s357 = smul.u32 4, %s356
        %v359 = vld [vmem:[%s347] sm:$0xff]
        %v360 = vld [vmem:[%s347 + $0x8] sm:$0xff]
        %v361 = vld [vmem:[%s347 + $0x10] sm:$0xff]
        %v362 = vld [vmem:[%s347 + $0x18] sm:$0xff]
        %v363 = vld [vmem:[%s347 + $0x20] sm:$0xff]
        %v364 = vld [vmem:[%s347 + $0x28] sm:$0xff]
        %v365 = vld [vmem:[%s347 + $0x30] sm:$0xff]
        %v366 = vld [vmem:[%s347 + $0x38] sm:$0xff]
        %v367 = vld [vmem:[%s347 + $0x40] sm:$0xff]
        %v368 = vld [vmem:[%s347 + $0x48] sm:$0xff]
        %v369 = vld [vmem:[%s347 + $0x50] sm:$0xff]
        %v370 = vld [vmem:[%s347 + $0x58] sm:$0xff]
        %v371 = vld [vmem:[%s347 + $0x60] sm:$0xff]
        %v372 = vld [vmem:[%s347 + $0x68] sm:$0xff]
        %v373 = vld [vmem:[%s347 + $0x70] sm:$0xff]
        %v374 = vld [vmem:[%s347 + $0x78] sm:$0xff]
        %v375 = vld [vmem:[%s347 + $0x80] sm:$0xff]
        %v376 = vld [vmem:[%s347 + $0x88] sm:$0xff]
        %v377 = vld [vmem:[%s347 + $0x90] sm:$0xff]
        %v378 = vld [vmem:[%s347 + $0x98] sm:$0xff]
        %v379 = vld [vmem:[%s347 + $0xa0] sm:$0xff]
        %v380 = vld [vmem:[%s347 + $0xa8] sm:$0xff]
        %v381 = vld [vmem:[%s347 + $0xb0] sm:$0xff]
        %v382 = vld [vmem:[%s347 + $0xb8] sm:$0xff]
        %v383 = vld [vmem:[%s347 + $0xc0] sm:$0xff]
        %v384 = vld [vmem:[%s347 + $0xc8] sm:$0xff]
        %v385 = vld [vmem:[%s347 + $0xd0] sm:$0xff]
        %v386 = vld [vmem:[%s347 + $0xd8] sm:$0xff]
        %v387 = vld [vmem:[%s347 + $0xe0] sm:$0xff]
        %v388 = vld [vmem:[%s347 + $0xe8] sm:$0xff]
        %v389 = vld [vmem:[%s347 + $0xf0] sm:$0xff]
        %v390 = vld [vmem:[%s347 + $0xf8] sm:$0xff]
        %v391 = vpack.c.bf16 %v360, %v359
        %v392 = vpack.c.bf16 %v362, %v361
        %v393 = vpack.c.bf16 %v364, %v363
        %v394 = vpack.c.bf16 %v366, %v365
        %v395 = vpack.c.bf16 %v368, %v367
        %v396 = vpack.c.bf16 %v370, %v369
        %v397 = vpack.c.bf16 %v372, %v371
        %v398 = vpack.c.bf16 %v374, %v373
        %v399 = vpack.c.bf16 %v376, %v375
        %v400 = vpack.c.bf16 %v378, %v377
        %v401 = vpack.c.bf16 %v380, %v379
        %v402 = vpack.c.bf16 %v382, %v381
        %v403 = vpack.c.bf16 %v384, %v383
        %v404 = vpack.c.bf16 %v386, %v385
        %v405 = vpack.c.bf16 %v388, %v387
        %v406 = vpack.c.bf16 %v390, %v389
        %v407 = vld [vmem:[%s1] sm:$0xf]
        %v408 = vld [vmem:[%s1 + $0x4] sm:$0xf]
        %v409 = vld [vmem:[%s1 + $0x8] sm:$0xf]
        %v410 = vld [vmem:[%s1 + $0xc] sm:$0xf]
        %v411 = vld [vmem:[%s2] sm:$0x1]
        %v413 = vperm.slane %v411, 0
        %v419 = vunpack.c.l.b16 %v407
        %v420 = vunpack.c.l.b16 %v408
        %v421 = vunpack.c.l.b16 %v409
        %v422 = vunpack.c.l.b16 %v410
        %v423 = vpack.c.b16 %v420, %v419
        %v424 = vpack.c.b16 %v422, %v421
        %vm427 = vcmask 261120
        %v429 = vsel %vm427, %v391, 0
        %v432 = vsel %vm427, %v392, 0
        %v435 = vsel %vm427, %v393, 0
        %v438 = vsel %vm427, %v394, 0
        %v441 = vsel %vm427, %v395, 0
        %v444 = vsel %vm427, %v396, 0
        %v447 = vsel %vm427, %v397, 0
        %v450 = vsel %vm427, %v398, 0
        %v453 = vsel %vm427, %v399, 0
        %v456 = vsel %vm427, %v400, 0
        %v459 = vsel %vm427, %v401, 0
        %v462 = vsel %vm427, %v402, 0
        %v465 = vsel %vm427, %v403, 0
        %v468 = vsel %vm427, %v404, 0
        %v471 = vsel %vm427, %v405, 0
        %v474 = vsel %vm427, %v406, 0
        %476 = vmatpush.bf16.msra.mxu0 0
        %477 = vmatpush.bf16.msra.mxu0 0
        %478 = vmatpush.bf16.msra.mxu0 0
        %479 = vmatpush.bf16.msra.mxu0 0
        %480 = vmatpush.bf16.msra.mxu0 0
        %481 = vmatpush.bf16.msra.mxu0 0
        %482 = vmatpush.bf16.msra.mxu0 %v424
        %483 = vmatpush.bf16.msra.mxu0 %v423
        %484 = vmatmul.bf16.gmra.mxu0 %v429
        %v485 = vpop.f32.mrf.mxu0
        %v486 = vadd.f32 %v413, %v485
        %v487 = vpop.f32.mrf.mxu0
        %v488 = vadd.f32 %v413, %v487
        %489 = vmatmul.bf16.gmra.mxu0 %v432
        %v490 = vpop.f32.mrf.mxu0
        %v491 = vadd.f32 %v413, %v490
        %v492 = vpop.f32.mrf.mxu0
        %v493 = vadd.f32 %v413, %v492
        %494 = vmatmul.bf16.gmra.mxu0 %v435
        %v495 = vpop.f32.mrf.mxu0
        %v496 = vadd.f32 %v413, %v495
        %v497 = vpop.f32.mrf.mxu0
        %v498 = vadd.f32 %v413, %v497
        %499 = vmatmul.bf16.gmra.mxu0 %v438
        %v500 = vpop.f32.mrf.mxu0
        %v501 = vadd.f32 %v413, %v500
        %v502 = vpop.f32.mrf.mxu0
        %v503 = vadd.f32 %v413, %v502
        %504 = vmatmul.bf16.gmra.mxu0 %v441
        %v505 = vpop.f32.mrf.mxu0
        %v506 = vadd.f32 %v413, %v505
        %v507 = vpop.f32.mrf.mxu0
        %v508 = vadd.f32 %v413, %v507
        %509 = vmatmul.bf16.gmra.mxu0 %v444
        %v510 = vpop.f32.mrf.mxu0
        %v511 = vadd.f32 %v413, %v510
        %v512 = vpop.f32.mrf.mxu0
        %v513 = vadd.f32 %v413, %v512
        %514 = vmatmul.bf16.gmra.mxu0 %v447
        %v515 = vpop.f32.mrf.mxu0
        %v516 = vadd.f32 %v413, %v515
        %v517 = vpop.f32.mrf.mxu0
        %v518 = vadd.f32 %v413, %v517
        %519 = vmatmul.bf16.gmra.mxu0 %v450
        %v520 = vpop.f32.mrf.mxu0
        %v521 = vadd.f32 %v413, %v520
        %v522 = vpop.f32.mrf.mxu0
        %v523 = vadd.f32 %v413, %v522
        %524 = vmatmul.bf16.gmra.mxu0 %v453
        %v525 = vpop.f32.mrf.mxu0
        %v526 = vadd.f32 %v413, %v525
        %v527 = vpop.f32.mrf.mxu0
        %v528 = vadd.f32 %v413, %v527
        %529 = vmatmul.bf16.gmra.mxu0 %v456
        %v530 = vpop.f32.mrf.mxu0
        %v531 = vadd.f32 %v413, %v530
        %v532 = vpop.f32.mrf.mxu0
        %v533 = vadd.f32 %v413, %v532
        %534 = vmatmul.bf16.gmra.mxu0 %v459
        %v535 = vpop.f32.mrf.mxu0
        %v536 = vadd.f32 %v413, %v535
        %v537 = vpop.f32.mrf.mxu0
        %v538 = vadd.f32 %v413, %v537
        %539 = vmatmul.bf16.gmra.mxu0 %v462
        %v540 = vpop.f32.mrf.mxu0
        %v541 = vadd.f32 %v413, %v540
        %v542 = vpop.f32.mrf.mxu0
        %v543 = vadd.f32 %v413, %v542
        %544 = vmatmul.bf16.gmra.mxu0 %v465
        %v545 = vpop.f32.mrf.mxu0
        %v546 = vadd.f32 %v413, %v545
        %v547 = vpop.f32.mrf.mxu0
        %v548 = vadd.f32 %v413, %v547
        %549 = vmatmul.bf16.gmra.mxu0 %v468
        %v550 = vpop.f32.mrf.mxu0
        %v551 = vadd.f32 %v413, %v550
        %v552 = vpop.f32.mrf.mxu0
        %v553 = vadd.f32 %v413, %v552
        %554 = vmatmul.bf16.gmra.mxu0 %v471
        %v555 = vpop.f32.mrf.mxu0
        %v556 = vadd.f32 %v413, %v555
        %v557 = vpop.f32.mrf.mxu0
        %v558 = vadd.f32 %v413, %v557
        %559 = vmatmul.bf16.gmra.mxu0 %v474
        %v560 = vpop.f32.mrf.mxu0
        %v561 = vadd.f32 %v413, %v560
        %v562 = vpop.f32.mrf.mxu0
        %v563 = vadd.f32 %v413, %v562
        %564 = vdwg.mxu0
        %v565 = vmax.f32 %v486, 0.0
        %v566 = vmax.f32 %v488, 0.0
        %v567 = vmax.f32 %v491, 0.0
        %v568 = vmax.f32 %v493, 0.0
        %v569 = vmax.f32 %v496, 0.0
        %v570 = vmax.f32 %v498, 0.0
        %v571 = vmax.f32 %v501, 0.0
        %v572 = vmax.f32 %v503, 0.0
        %v573 = vmax.f32 %v506, 0.0
        %v574 = vmax.f32 %v508, 0.0
        %v575 = vmax.f32 %v511, 0.0
        %v576 = vmax.f32 %v513, 0.0
        %v577 = vmax.f32 %v516, 0.0
        %v578 = vmax.f32 %v518, 0.0
        %v579 = vmax.f32 %v521, 0.0
        %v580 = vmax.f32 %v523, 0.0
        %v581 = vmax.f32 %v526, 0.0
        %v582 = vmax.f32 %v528, 0.0
        %v583 = vmax.f32 %v531, 0.0
        %v584 = vmax.f32 %v533, 0.0
        %v585 = vmax.f32 %v536, 0.0
        %v586 = vmax.f32 %v538, 0.0
        %v587 = vmax.f32 %v541, 0.0
        %v588 = vmax.f32 %v543, 0.0
        %v589 = vmax.f32 %v546, 0.0
        %v590 = vmax.f32 %v548, 0.0
        %v591 = vmax.f32 %v551, 0.0
        %v592 = vmax.f32 %v553, 0.0
        %v593 = vmax.f32 %v556, 0.0
        %v594 = vmax.f32 %v558, 0.0
        %v595 = vmax.f32 %v561, 0.0
        %v596 = vmax.f32 %v563, 0.0
        %v597 = vpack.c.bf16 %v566, %v565
        %v598 = vpack.c.bf16 %v568, %v567
        %v599 = vpack.c.bf16 %v570, %v569
        %v600 = vpack.c.bf16 %v572, %v571
        %v601 = vpack.c.bf16 %v574, %v573
        %v602 = vpack.c.bf16 %v576, %v575
        %v603 = vpack.c.bf16 %v578, %v577
        %v604 = vpack.c.bf16 %v580, %v579
        %v605 = vpack.c.bf16 %v582, %v581
        %v606 = vpack.c.bf16 %v584, %v583
        %v607 = vpack.c.bf16 %v586, %v585
        %v608 = vpack.c.bf16 %v588, %v587
        %v609 = vpack.c.bf16 %v590, %v589
        %v610 = vpack.c.bf16 %v592, %v591
        %v611 = vpack.c.bf16 %v594, %v593
        %v612 = vpack.c.bf16 %v596, %v595
        %v613 = vld [vmem:[%s3] sm:$0xf]
        %v614 = vld [vmem:[%s3 + $0x4] sm:$0xf]
        %v615 = vld [vmem:[%s3 + $0x8] sm:$0xf]
        %v616 = vld [vmem:[%s3 + $0xc] sm:$0xf]
        %v617 = vld [vmem:[%s3 + $0x10] sm:$0xf]
        %v618 = vld [vmem:[%s3 + $0x14] sm:$0xf]
        %v619 = vld [vmem:[%s3 + $0x18] sm:$0xf]
        %v620 = vld [vmem:[%s3 + $0x1c] sm:$0xf]
        %v621 = vld [vmem:[%s3 + $0x20] sm:$0xf]
        %v622 = vld [vmem:[%s3 + $0x24] sm:$0xf]
        %v623 = vld [vmem:[%s3 + $0x28] sm:$0xf]
        %v624 = vld [vmem:[%s3 + $0x2c] sm:$0xf]
        %v625 = vld [vmem:[%s3 + $0x30] sm:$0xf]
        %v626 = vld [vmem:[%s3 + $0x34] sm:$0xf]
        %v627 = vld [vmem:[%s3 + $0x38] sm:$0xf]
        %v628 = vld [vmem:[%s3 + $0x3c] sm:$0xf]
        %v629 = vld [vmem:[%s4] sm:$0x1]
        %v631 = vperm.slane %v629, 0
        %v649 = vunpack.c.l.b16 %v613
        %v650 = vunpack.c.l.b16 %v614
        %v651 = vunpack.c.l.b16 %v615
        %v652 = vunpack.c.l.b16 %v616
        %v653 = vunpack.c.l.b16 %v617
        %v654 = vunpack.c.l.b16 %v618
        %v655 = vunpack.c.l.b16 %v619
        %v656 = vunpack.c.l.b16 %v620
        %v657 = vunpack.c.l.b16 %v621
        %v658 = vunpack.c.l.b16 %v622
        %v659 = vunpack.c.l.b16 %v623
        %v660 = vunpack.c.l.b16 %v624
        %v661 = vunpack.c.l.b16 %v625
        %v662 = vunpack.c.l.b16 %v626
        %v663 = vunpack.c.l.b16 %v627
        %v664 = vunpack.c.l.b16 %v628
        %v665 = vpack.c.b16 %v650, %v649
        %v666 = vpack.c.b16 %v652, %v651
        %v667 = vpack.c.b16 %v654, %v653
        %v668 = vpack.c.b16 %v656, %v655
        %v669 = vpack.c.b16 %v658, %v657
        %v670 = vpack.c.b16 %v660, %v659
        %v671 = vpack.c.b16 %v662, %v661
        %v672 = vpack.c.b16 %v664, %v663
        %681 = vmatpush.bf16.msra.mxu0 %v672
        %682 = vmatpush.bf16.msra.mxu0 %v671
        %683 = vmatpush.bf16.msra.mxu0 %v670
        %684 = vmatpush.bf16.msra.mxu0 %v669
        %685 = vmatpush.bf16.msra.mxu0 %v668
        %686 = vmatpush.bf16.msra.mxu0 %v667
        %687 = vmatpush.bf16.msra.mxu0 %v666
        %688 = vmatpush.bf16.msra.mxu0 %v665
        %689 = vmatmul.bf16.gmra.mxu0 %v597
        %v690 = vpop.f32.mrf.mxu0
        %v691 = vadd.f32 %v631, %v690
        %v692 = vpop.f32.mrf.mxu0
        %v693 = vadd.f32 %v631, %v692
        %694 = vmatmul.bf16.gmra.mxu0 %v598
        %v695 = vpop.f32.mrf.mxu0
        %v696 = vadd.f32 %v631, %v695
        %v697 = vpop.f32.mrf.mxu0
        %v698 = vadd.f32 %v631, %v697
        %699 = vmatmul.bf16.gmra.mxu0 %v599
        %v700 = vpop.f32.mrf.mxu0
        %v701 = vadd.f32 %v631, %v700
        %v702 = vpop.f32.mrf.mxu0
        %v703 = vadd.f32 %v631, %v702
        %704 = vmatmul.bf16.gmra.mxu0 %v600
        %v705 = vpop.f32.mrf.mxu0
        %v706 = vadd.f32 %v631, %v705
        %v707 = vpop.f32.mrf.mxu0
        %v708 = vadd.f32 %v631, %v707
        %709 = vmatmul.bf16.gmra.mxu0 %v601
        %v710 = vpop.f32.mrf.mxu0
        %v711 = vadd.f32 %v631, %v710
        %v712 = vpop.f32.mrf.mxu0
        %v713 = vadd.f32 %v631, %v712
        %714 = vmatmul.bf16.gmra.mxu0 %v602
        %v715 = vpop.f32.mrf.mxu0
        %v716 = vadd.f32 %v631, %v715
        %v717 = vpop.f32.mrf.mxu0
        %v718 = vadd.f32 %v631, %v717
        %719 = vmatmul.bf16.gmra.mxu0 %v603
        %v720 = vpop.f32.mrf.mxu0
        %v721 = vadd.f32 %v631, %v720
        %v722 = vpop.f32.mrf.mxu0
        %v723 = vadd.f32 %v631, %v722
        %724 = vmatmul.bf16.gmra.mxu0 %v604
        %v725 = vpop.f32.mrf.mxu0
        %v726 = vadd.f32 %v631, %v725
        %v727 = vpop.f32.mrf.mxu0
        %v728 = vadd.f32 %v631, %v727
        %729 = vmatmul.bf16.gmra.mxu0 %v605
        %v730 = vpop.f32.mrf.mxu0
        %v731 = vadd.f32 %v631, %v730
        %v732 = vpop.f32.mrf.mxu0
        %v733 = vadd.f32 %v631, %v732
        %734 = vmatmul.bf16.gmra.mxu0 %v606
        %v735 = vpop.f32.mrf.mxu0
        %v736 = vadd.f32 %v631, %v735
        %v737 = vpop.f32.mrf.mxu0
        %v738 = vadd.f32 %v631, %v737
        %739 = vmatmul.bf16.gmra.mxu0 %v607
        %v740 = vpop.f32.mrf.mxu0
        %v741 = vadd.f32 %v631, %v740
        %v742 = vpop.f32.mrf.mxu0
        %v743 = vadd.f32 %v631, %v742
        %744 = vmatmul.bf16.gmra.mxu0 %v608
        %v745 = vpop.f32.mrf.mxu0
        %v746 = vadd.f32 %v631, %v745
        %v747 = vpop.f32.mrf.mxu0
        %v748 = vadd.f32 %v631, %v747
        %749 = vmatmul.bf16.gmra.mxu0 %v609
        %v750 = vpop.f32.mrf.mxu0
        %v751 = vadd.f32 %v631, %v750
        %v752 = vpop.f32.mrf.mxu0
        %v753 = vadd.f32 %v631, %v752
        %754 = vmatmul.bf16.gmra.mxu0 %v610
        %v755 = vpop.f32.mrf.mxu0
        %v756 = vadd.f32 %v631, %v755
        %v757 = vpop.f32.mrf.mxu0
        %v758 = vadd.f32 %v631, %v757
        %759 = vmatmul.bf16.gmra.mxu0 %v611
        %v760 = vpop.f32.mrf.mxu0
        %v761 = vadd.f32 %v631, %v760
        %v762 = vpop.f32.mrf.mxu0
        %v763 = vadd.f32 %v631, %v762
        %764 = vmatmul.bf16.gmra.mxu0 %v612
        %v765 = vpop.f32.mrf.mxu0
        %v766 = vadd.f32 %v631, %v765
        %v767 = vpop.f32.mrf.mxu0
        %v768 = vadd.f32 %v631, %v767
        %769 = vdwg.mxu0
        %v770 = vmax.f32 %v691, 0.0
        %v771 = vmax.f32 %v693, 0.0
        %v772 = vmax.f32 %v696, 0.0
        %v773 = vmax.f32 %v698, 0.0
        %v774 = vmax.f32 %v701, 0.0
        %v775 = vmax.f32 %v703, 0.0
        %v776 = vmax.f32 %v706, 0.0
        %v777 = vmax.f32 %v708, 0.0
        %v778 = vmax.f32 %v711, 0.0
        %v779 = vmax.f32 %v713, 0.0
        %v780 = vmax.f32 %v716, 0.0
        %v781 = vmax.f32 %v718, 0.0
        %v782 = vmax.f32 %v721, 0.0
        %v783 = vmax.f32 %v723, 0.0
        %v784 = vmax.f32 %v726, 0.0
        %v785 = vmax.f32 %v728, 0.0
        %v786 = vmax.f32 %v731, 0.0
        %v787 = vmax.f32 %v733, 0.0
        %v788 = vmax.f32 %v736, 0.0
        %v789 = vmax.f32 %v738, 0.0
        %v790 = vmax.f32 %v741, 0.0
        %v791 = vmax.f32 %v743, 0.0
        %v792 = vmax.f32 %v746, 0.0
        %v793 = vmax.f32 %v748, 0.0
        %v794 = vmax.f32 %v751, 0.0
        %v795 = vmax.f32 %v753, 0.0
        %v796 = vmax.f32 %v756, 0.0
        %v797 = vmax.f32 %v758, 0.0
        %v798 = vmax.f32 %v761, 0.0
        %v799 = vmax.f32 %v763, 0.0
        %v800 = vmax.f32 %v766, 0.0
        %v801 = vmax.f32 %v768, 0.0
        %v802 = vpack.c.bf16 %v771, %v770
        %v803 = vpack.c.bf16 %v773, %v772
        %v804 = vpack.c.bf16 %v775, %v774
        %v805 = vpack.c.bf16 %v777, %v776
        %v806 = vpack.c.bf16 %v779, %v778
        %v807 = vpack.c.bf16 %v781, %v780
        %v808 = vpack.c.bf16 %v783, %v782
        %v809 = vpack.c.bf16 %v785, %v784
        %v810 = vpack.c.bf16 %v787, %v786
        %v811 = vpack.c.bf16 %v789, %v788
        %v812 = vpack.c.bf16 %v791, %v790
        %v813 = vpack.c.bf16 %v793, %v792
        %v814 = vpack.c.bf16 %v795, %v794
        %v815 = vpack.c.bf16 %v797, %v796
        %v816 = vpack.c.bf16 %v799, %v798
        %v817 = vpack.c.bf16 %v801, %v800
        %v818 = vld [vmem:[%s5] sm:$0xf]
        %v819 = vld [vmem:[%s5 + $0x4] sm:$0xf]
        %v820 = vld [vmem:[%s5 + $0x8] sm:$0xf]
        %v821 = vld [vmem:[%s5 + $0xc] sm:$0xf]
        %v822 = vld [vmem:[%s5 + $0x10] sm:$0xf]
        %v823 = vld [vmem:[%s5 + $0x14] sm:$0xf]
        %v824 = vld [vmem:[%s5 + $0x18] sm:$0xf]
        %v825 = vld [vmem:[%s5 + $0x1c] sm:$0xf]
        %v826 = vld [vmem:[%s5 + $0x20] sm:$0xf]
        %v827 = vld [vmem:[%s5 + $0x24] sm:$0xf]
        %v828 = vld [vmem:[%s5 + $0x28] sm:$0xf]
        %v829 = vld [vmem:[%s5 + $0x2c] sm:$0xf]
        %v830 = vld [vmem:[%s5 + $0x30] sm:$0xf]
        %v831 = vld [vmem:[%s5 + $0x34] sm:$0xf]
        %v832 = vld [vmem:[%s5 + $0x38] sm:$0xf]
        %v833 = vld [vmem:[%s5 + $0x3c] sm:$0xf]
        %v834 = vld [vmem:[%s6] sm:$0x1]
        %v836 = vperm.slane %v834, 0
        %v854 = vunpack.c.l.b16 %v818
        %v855 = vunpack.c.l.b16 %v819
        %v856 = vunpack.c.l.b16 %v820
        %v857 = vunpack.c.l.b16 %v821
        %v858 = vunpack.c.l.b16 %v822
        %v859 = vunpack.c.l.b16 %v823
        %v860 = vunpack.c.l.b16 %v824
        %v861 = vunpack.c.l.b16 %v825
        %v862 = vunpack.c.l.b16 %v826
        %v863 = vunpack.c.l.b16 %v827
        %v864 = vunpack.c.l.b16 %v828
        %v865 = vunpack.c.l.b16 %v829
        %v866 = vunpack.c.l.b16 %v830
        %v867 = vunpack.c.l.b16 %v831
        %v868 = vunpack.c.l.b16 %v832
        %v869 = vunpack.c.l.b16 %v833
        %v870 = vpack.c.b16 %v855, %v854
        %v871 = vpack.c.b16 %v857, %v856
        %v872 = vpack.c.b16 %v859, %v858
        %v873 = vpack.c.b16 %v861, %v860
        %v874 = vpack.c.b16 %v863, %v862
        %v875 = vpack.c.b16 %v865, %v864
        %v876 = vpack.c.b16 %v867, %v866
        %v877 = vpack.c.b16 %v869, %v868
        %886 = vmatpush.bf16.msra.mxu0 %v877
        %887 = vmatpush.bf16.msra.mxu0 %v876
        %888 = vmatpush.bf16.msra.mxu0 %v875
        %889 = vmatpush.bf16.msra.mxu0 %v874
        %890 = vmatpush.bf16.msra.mxu0 %v873
        %891 = vmatpush.bf16.msra.mxu0 %v872
        %892 = vmatpush.bf16.msra.mxu0 %v871
        %893 = vmatpush.bf16.msra.mxu0 %v870
        %894 = vmatmul.bf16.gmra.mxu0 %v802
        %v895 = vpop.f32.mrf.mxu0
        %v896 = vadd.f32 %v836, %v895
        %v897 = vpop.f32.mrf.mxu0
        %v898 = vadd.f32 %v836, %v897
        %899 = vmatmul.bf16.gmra.mxu0 %v803
        %v900 = vpop.f32.mrf.mxu0
        %v901 = vadd.f32 %v836, %v900
        %v902 = vpop.f32.mrf.mxu0
        %v903 = vadd.f32 %v836, %v902
        %904 = vmatmul.bf16.gmra.mxu0 %v804
        %v905 = vpop.f32.mrf.mxu0
        %v906 = vadd.f32 %v836, %v905
        %v907 = vpop.f32.mrf.mxu0
        %v908 = vadd.f32 %v836, %v907
        %909 = vmatmul.bf16.gmra.mxu0 %v805
        %v910 = vpop.f32.mrf.mxu0
        %v911 = vadd.f32 %v836, %v910
        %v912 = vpop.f32.mrf.mxu0
        %v913 = vadd.f32 %v836, %v912
        %914 = vmatmul.bf16.gmra.mxu0 %v806
        %v915 = vpop.f32.mrf.mxu0
        %v916 = vadd.f32 %v836, %v915
        %v917 = vpop.f32.mrf.mxu0
        %v918 = vadd.f32 %v836, %v917
        %919 = vmatmul.bf16.gmra.mxu0 %v807
        %v920 = vpop.f32.mrf.mxu0
        %v921 = vadd.f32 %v836, %v920
        %v922 = vpop.f32.mrf.mxu0
        %v923 = vadd.f32 %v836, %v922
        %924 = vmatmul.bf16.gmra.mxu0 %v808
        %v925 = vpop.f32.mrf.mxu0
        %v926 = vadd.f32 %v836, %v925
        %v927 = vpop.f32.mrf.mxu0
        %v928 = vadd.f32 %v836, %v927
        %929 = vmatmul.bf16.gmra.mxu0 %v809
        %v930 = vpop.f32.mrf.mxu0
        %v931 = vadd.f32 %v836, %v930
        %v932 = vpop.f32.mrf.mxu0
        %v933 = vadd.f32 %v836, %v932
        %934 = vmatmul.bf16.gmra.mxu0 %v810
        %v935 = vpop.f32.mrf.mxu0
        %v936 = vadd.f32 %v836, %v935
        %v937 = vpop.f32.mrf.mxu0
        %v938 = vadd.f32 %v836, %v937
        %939 = vmatmul.bf16.gmra.mxu0 %v811
        %v940 = vpop.f32.mrf.mxu0
        %v941 = vadd.f32 %v836, %v940
        %v942 = vpop.f32.mrf.mxu0
        %v943 = vadd.f32 %v836, %v942
        %944 = vmatmul.bf16.gmra.mxu0 %v812
        %v945 = vpop.f32.mrf.mxu0
        %v946 = vadd.f32 %v836, %v945
        %v947 = vpop.f32.mrf.mxu0
        %v948 = vadd.f32 %v836, %v947
        %949 = vmatmul.bf16.gmra.mxu0 %v813
        %v950 = vpop.f32.mrf.mxu0
        %v951 = vadd.f32 %v836, %v950
        %v952 = vpop.f32.mrf.mxu0
        %v953 = vadd.f32 %v836, %v952
        %954 = vmatmul.bf16.gmra.mxu0 %v814
        %v955 = vpop.f32.mrf.mxu0
        %v956 = vadd.f32 %v836, %v955
        %v957 = vpop.f32.mrf.mxu0
        %v958 = vadd.f32 %v836, %v957
        %959 = vmatmul.bf16.gmra.mxu0 %v815
        %v960 = vpop.f32.mrf.mxu0
        %v961 = vadd.f32 %v836, %v960
        %v962 = vpop.f32.mrf.mxu0
        %v963 = vadd.f32 %v836, %v962
        %964 = vmatmul.bf16.gmra.mxu0 %v816
        %v965 = vpop.f32.mrf.mxu0
        %v966 = vadd.f32 %v836, %v965
        %v967 = vpop.f32.mrf.mxu0
        %v968 = vadd.f32 %v836, %v967
        %969 = vmatmul.bf16.gmra.mxu0 %v817
        %v970 = vpop.f32.mrf.mxu0
        %v971 = vadd.f32 %v836, %v970
        %v972 = vpop.f32.mrf.mxu0
        %v973 = vadd.f32 %v836, %v972
        %974 = vdwg.mxu0
        %v975 = vmax.f32 %v896, 0.0
        %v976 = vmax.f32 %v898, 0.0
        %v977 = vmax.f32 %v901, 0.0
        %v978 = vmax.f32 %v903, 0.0
        %v979 = vmax.f32 %v906, 0.0
        %v980 = vmax.f32 %v908, 0.0
        %v981 = vmax.f32 %v911, 0.0
        %v982 = vmax.f32 %v913, 0.0
        %v983 = vmax.f32 %v916, 0.0
        %v984 = vmax.f32 %v918, 0.0
        %v985 = vmax.f32 %v921, 0.0
        %v986 = vmax.f32 %v923, 0.0
        %v987 = vmax.f32 %v926, 0.0
        %v988 = vmax.f32 %v928, 0.0
        %v989 = vmax.f32 %v931, 0.0
        %v990 = vmax.f32 %v933, 0.0
        %v991 = vmax.f32 %v936, 0.0
        %v992 = vmax.f32 %v938, 0.0
        %v993 = vmax.f32 %v941, 0.0
        %v994 = vmax.f32 %v943, 0.0
        %v995 = vmax.f32 %v946, 0.0
        %v996 = vmax.f32 %v948, 0.0
        %v997 = vmax.f32 %v951, 0.0
        %v998 = vmax.f32 %v953, 0.0
        %v999 = vmax.f32 %v956, 0.0
        %v1000 = vmax.f32 %v958, 0.0
        %v1001 = vmax.f32 %v961, 0.0
        %v1002 = vmax.f32 %v963, 0.0
        %v1003 = vmax.f32 %v966, 0.0
        %v1004 = vmax.f32 %v968, 0.0
        %v1005 = vmax.f32 %v971, 0.0
        %v1006 = vmax.f32 %v973, 0.0
        %v1007 = vpack.c.bf16 %v976, %v975
        %v1008 = vpack.c.bf16 %v978, %v977
        %v1009 = vpack.c.bf16 %v980, %v979
        %v1010 = vpack.c.bf16 %v982, %v981
        %v1011 = vpack.c.bf16 %v984, %v983
        %v1012 = vpack.c.bf16 %v986, %v985
        %v1013 = vpack.c.bf16 %v988, %v987
        %v1014 = vpack.c.bf16 %v990, %v989
        %v1015 = vpack.c.bf16 %v992, %v991
        %v1016 = vpack.c.bf16 %v994, %v993
        %v1017 = vpack.c.bf16 %v996, %v995
        %v1018 = vpack.c.bf16 %v998, %v997
        %v1019 = vpack.c.bf16 %v1000, %v999
        %v1020 = vpack.c.bf16 %v1002, %v1001
        %v1021 = vpack.c.bf16 %v1004, %v1003
        %v1022 = vpack.c.bf16 %v1006, %v1005
        %v1023 = vld [vmem:[%s7] sm:$0xf]
        %v1024 = vld [vmem:[%s7 + $0x4] sm:$0xf]
        %v1025 = vld [vmem:[%s7 + $0x8] sm:$0xf]
        %v1026 = vld [vmem:[%s7 + $0xc] sm:$0xf]
        %v1027 = vld [vmem:[%s7 + $0x10] sm:$0xf]
        %v1028 = vld [vmem:[%s7 + $0x14] sm:$0xf]
        %v1029 = vld [vmem:[%s7 + $0x18] sm:$0xf]
        %v1030 = vld [vmem:[%s7 + $0x1c] sm:$0xf]
        %v1031 = vld [vmem:[%s7 + $0x20] sm:$0xf]
        %v1032 = vld [vmem:[%s7 + $0x24] sm:$0xf]
        %v1033 = vld [vmem:[%s7 + $0x28] sm:$0xf]
        %v1034 = vld [vmem:[%s7 + $0x2c] sm:$0xf]
        %v1035 = vld [vmem:[%s7 + $0x30] sm:$0xf]
        %v1036 = vld [vmem:[%s7 + $0x34] sm:$0xf]
        %v1037 = vld [vmem:[%s7 + $0x38] sm:$0xf]
        %v1038 = vld [vmem:[%s7 + $0x3c] sm:$0xf]
        %v1039 = vld [vmem:[%s8] sm:$0x1]
        %v1041 = vperm.slane %v1039, 0
        %v1059 = vunpack.c.l.b16 %v1023
        %v1060 = vunpack.c.l.b16 %v1024
        %v1061 = vunpack.c.l.b16 %v1025
        %v1062 = vunpack.c.l.b16 %v1026
        %v1063 = vunpack.c.l.b16 %v1027
        %v1064 = vunpack.c.l.b16 %v1028
        %v1065 = vunpack.c.l.b16 %v1029
        %v1066 = vunpack.c.l.b16 %v1030
        %v1067 = vunpack.c.l.b16 %v1031
        %v1068 = vunpack.c.l.b16 %v1032
        %v1069 = vunpack.c.l.b16 %v1033
        %v1070 = vunpack.c.l.b16 %v1034
        %v1071 = vunpack.c.l.b16 %v1035
        %v1072 = vunpack.c.l.b16 %v1036
        %v1073 = vunpack.c.l.b16 %v1037
        %v1074 = vunpack.c.l.b16 %v1038
        %v1075 = vpack.c.b16 %v1060, %v1059
        %v1076 = vpack.c.b16 %v1062, %v1061
        %v1077 = vpack.c.b16 %v1064, %v1063
        %v1078 = vpack.c.b16 %v1066, %v1065
        %v1079 = vpack.c.b16 %v1068, %v1067
        %v1080 = vpack.c.b16 %v1070, %v1069
        %v1081 = vpack.c.b16 %v1072, %v1071
        %v1082 = vpack.c.b16 %v1074, %v1073
        %1091 = vmatpush.bf16.msra.mxu0 %v1082
        %1092 = vmatpush.bf16.msra.mxu0 %v1081
        %1093 = vmatpush.bf16.msra.mxu0 %v1080
        %1094 = vmatpush.bf16.msra.mxu0 %v1079
        %1095 = vmatpush.bf16.msra.mxu0 %v1078
        %1096 = vmatpush.bf16.msra.mxu0 %v1077
        %1097 = vmatpush.bf16.msra.mxu0 %v1076
        %1098 = vmatpush.bf16.msra.mxu0 %v1075
        %1099 = vmatmul.bf16.gmra.mxu0 %v1007
        %v1100 = vpop.f32.mrf.mxu0
        %v1101 = vadd.f32 %v1041, %v1100
        %v1102 = vpop.f32.mrf.mxu0
        %v1103 = vadd.f32 %v1041, %v1102
        %1104 = vmatmul.bf16.gmra.mxu0 %v1008
        %v1105 = vpop.f32.mrf.mxu0
        %v1106 = vadd.f32 %v1041, %v1105
        %v1107 = vpop.f32.mrf.mxu0
        %v1108 = vadd.f32 %v1041, %v1107
        %1109 = vmatmul.bf16.gmra.mxu0 %v1009
        %v1110 = vpop.f32.mrf.mxu0
        %v1111 = vadd.f32 %v1041, %v1110
        %v1112 = vpop.f32.mrf.mxu0
        %v1113 = vadd.f32 %v1041, %v1112
        %1114 = vmatmul.bf16.gmra.mxu0 %v1010
        %v1115 = vpop.f32.mrf.mxu0
        %v1116 = vadd.f32 %v1041, %v1115
        %v1117 = vpop.f32.mrf.mxu0
        %v1118 = vadd.f32 %v1041, %v1117
        %1119 = vmatmul.bf16.gmra.mxu0 %v1011
        %v1120 = vpop.f32.mrf.mxu0
        %v1121 = vadd.f32 %v1041, %v1120
        %v1122 = vpop.f32.mrf.mxu0
        %v1123 = vadd.f32 %v1041, %v1122
        %1124 = vmatmul.bf16.gmra.mxu0 %v1012
        %v1125 = vpop.f32.mrf.mxu0
        %v1126 = vadd.f32 %v1041, %v1125
        %v1127 = vpop.f32.mrf.mxu0
        %v1128 = vadd.f32 %v1041, %v1127
        %1129 = vmatmul.bf16.gmra.mxu0 %v1013
        %v1130 = vpop.f32.mrf.mxu0
        %v1131 = vadd.f32 %v1041, %v1130
        %v1132 = vpop.f32.mrf.mxu0
        %v1133 = vadd.f32 %v1041, %v1132
        %1134 = vmatmul.bf16.gmra.mxu0 %v1014
        %v1135 = vpop.f32.mrf.mxu0
        %v1136 = vadd.f32 %v1041, %v1135
        %v1137 = vpop.f32.mrf.mxu0
        %v1138 = vadd.f32 %v1041, %v1137
        %1139 = vmatmul.bf16.gmra.mxu0 %v1015
        %v1140 = vpop.f32.mrf.mxu0
        %v1141 = vadd.f32 %v1041, %v1140
        %v1142 = vpop.f32.mrf.mxu0
        %v1143 = vadd.f32 %v1041, %v1142
        %1144 = vmatmul.bf16.gmra.mxu0 %v1016
        %v1145 = vpop.f32.mrf.mxu0
        %v1146 = vadd.f32 %v1041, %v1145
        %v1147 = vpop.f32.mrf.mxu0
        %v1148 = vadd.f32 %v1041, %v1147
        %1149 = vmatmul.bf16.gmra.mxu0 %v1017
        %v1150 = vpop.f32.mrf.mxu0
        %v1151 = vadd.f32 %v1041, %v1150
        %v1152 = vpop.f32.mrf.mxu0
        %v1153 = vadd.f32 %v1041, %v1152
        %1154 = vmatmul.bf16.gmra.mxu0 %v1018
        %v1155 = vpop.f32.mrf.mxu0
        %v1156 = vadd.f32 %v1041, %v1155
        %v1157 = vpop.f32.mrf.mxu0
        %v1158 = vadd.f32 %v1041, %v1157
        %1159 = vmatmul.bf16.gmra.mxu0 %v1019
        %v1160 = vpop.f32.mrf.mxu0
        %v1161 = vadd.f32 %v1041, %v1160
        %v1162 = vpop.f32.mrf.mxu0
        %v1163 = vadd.f32 %v1041, %v1162
        %1164 = vmatmul.bf16.gmra.mxu0 %v1020
        %v1165 = vpop.f32.mrf.mxu0
        %v1166 = vadd.f32 %v1041, %v1165
        %v1167 = vpop.f32.mrf.mxu0
        %v1168 = vadd.f32 %v1041, %v1167
        %1169 = vmatmul.bf16.gmra.mxu0 %v1021
        %v1170 = vpop.f32.mrf.mxu0
        %v1171 = vadd.f32 %v1041, %v1170
        %v1172 = vpop.f32.mrf.mxu0
        %v1173 = vadd.f32 %v1041, %v1172
        %1174 = vmatmul.bf16.gmra.mxu0 %v1022
        %v1175 = vpop.f32.mrf.mxu0
        %v1176 = vadd.f32 %v1041, %v1175
        %v1177 = vpop.f32.mrf.mxu0
        %v1178 = vadd.f32 %v1041, %v1177
        %1179 = vdwg.mxu0
        %v1180 = vpack.c.bf16 %v1101, %v1101
        %v1181 = vpack.c.bf16 %v1103, %v1103
        %v1182 = vpack.c.bf16 %v1106, %v1106
        %v1183 = vpack.c.bf16 %v1108, %v1108
        %v1184 = vpack.c.bf16 %v1111, %v1111
        %v1185 = vpack.c.bf16 %v1113, %v1113
        %v1186 = vpack.c.bf16 %v1116, %v1116
        %v1187 = vpack.c.bf16 %v1118, %v1118
        %v1188 = vpack.c.bf16 %v1121, %v1121
        %v1189 = vpack.c.bf16 %v1123, %v1123
        %v1190 = vpack.c.bf16 %v1126, %v1126
        %v1191 = vpack.c.bf16 %v1128, %v1128
        %v1192 = vpack.c.bf16 %v1131, %v1131
        %v1193 = vpack.c.bf16 %v1133, %v1133
        %v1194 = vpack.c.bf16 %v1136, %v1136
        %v1195 = vpack.c.bf16 %v1138, %v1138
        %v1196 = vpack.c.bf16 %v1141, %v1141
        %v1197 = vpack.c.bf16 %v1143, %v1143
        %v1198 = vpack.c.bf16 %v1146, %v1146
        %v1199 = vpack.c.bf16 %v1148, %v1148
        %v1200 = vpack.c.bf16 %v1151, %v1151
        %v1201 = vpack.c.bf16 %v1153, %v1153
        %v1202 = vpack.c.bf16 %v1156, %v1156
        %v1203 = vpack.c.bf16 %v1158, %v1158
        %v1204 = vpack.c.bf16 %v1161, %v1161
        %v1205 = vpack.c.bf16 %v1163, %v1163
        %v1206 = vpack.c.bf16 %v1166, %v1166
        %v1207 = vpack.c.bf16 %v1168, %v1168
        %v1208 = vpack.c.bf16 %v1171, %v1171
        %v1209 = vpack.c.bf16 %v1173, %v1173
        %v1210 = vpack.c.bf16 %v1176, %v1176
        %v1211 = vpack.c.bf16 %v1178, %v1178
        %1212 = vst [vmem:[%s338] sm:$0xf] %v1180
        %1213 = vst [vmem:[%s338 + $0x4] sm:$0xf] %v1181
        %1214 = vst [vmem:[%s338 + $0x8] sm:$0xf] %v1182
        %1215 = vst [vmem:[%s338 + $0xc] sm:$0xf] %v1183
        %1216 = vst [vmem:[%s338 + $0x10] sm:$0xf] %v1184
        %1217 = vst [vmem:[%s338 + $0x14] sm:$0xf] %v1185
        %1218 = vst [vmem:[%s338 + $0x18] sm:$0xf] %v1186
        %1219 = vst [vmem:[%s338 + $0x1c] sm:$0xf] %v1187
        %1220 = vst [vmem:[%s338 + $0x20] sm:$0xf] %v1188
        %1221 = vst [vmem:[%s338 + $0x24] sm:$0xf] %v1189
        %1222 = vst [vmem:[%s338 + $0x28] sm:$0xf] %v1190
        %1223 = vst [vmem:[%s338 + $0x2c] sm:$0xf] %v1191
        %1224 = vst [vmem:[%s338 + $0x30] sm:$0xf] %v1192
        %1225 = vst [vmem:[%s338 + $0x34] sm:$0xf] %v1193
        %1226 = vst [vmem:[%s338 + $0x38] sm:$0xf] %v1194
        %1227 = vst [vmem:[%s338 + $0x3c] sm:$0xf] %v1195
        %1228 = vst [vmem:[%s338 + $0x40] sm:$0xf] %v1196
        %1229 = vst [vmem:[%s338 + $0x44] sm:$0xf] %v1197
        %1230 = vst [vmem:[%s338 + $0x48] sm:$0xf] %v1198
        %1231 = vst [vmem:[%s338 + $0x4c] sm:$0xf] %v1199
        %1232 = vst [vmem:[%s338 + $0x50] sm:$0xf] %v1200
        %1233 = vst [vmem:[%s338 + $0x54] sm:$0xf] %v1201
        %1234 = vst [vmem:[%s338 + $0x58] sm:$0xf] %v1202
        %1235 = vst [vmem:[%s338 + $0x5c] sm:$0xf] %v1203
        %1236 = vst [vmem:[%s338 + $0x60] sm:$0xf] %v1204
        %1237 = vst [vmem:[%s338 + $0x64] sm:$0xf] %v1205
        %1238 = vst [vmem:[%s338 + $0x68] sm:$0xf] %v1206
        %1239 = vst [vmem:[%s338 + $0x6c] sm:$0xf] %v1207
        %1240 = vst [vmem:[%s338 + $0x70] sm:$0xf] %v1208
        %1241 = vst [vmem:[%s338 + $0x74] sm:$0xf] %v1209
        %1242 = vst [vmem:[%s338 + $0x78] sm:$0xf] %v1210
        %1243 = vst [vmem:[%s338 + $0x7c] sm:$0xf] %v1211
        %s1244 = sand.u32 %s225, 1
        %s1245 = scalar_lea.sflag [#allocation3], %s1244
        %s1246 = sand.u32 %s225, 1
        %s1247 = smul.addr %s1246, 128
        %s1248 = scalar_lea.vmem [#allocation2], %s1247
        // Predicated region
        $region57: #{tpu_custom_call.1} parent=55 // pred_check
          %p1249 = pneg %p235
        $region58: #{tpu_custom_call.1} parent=55 // pred_check_branch
          %1251 = sbr.rel (%p1249) target = $region60
        $region59: #{tpu_custom_call.1} parent=55 // pred_region
          %s1252 = smul.u32 32, %s23
          %s1253 = ssub.s32 63, %s1252
          %p1254 = scmp.lt.s32.totalorder %s1253, 32
          %s1255 = scalar_select %p1254, %s1253, 32
          %s1256 = smul.u32 4, %s1255
          %s1257 = ssub.s32 128, %s1256
          %s1258 = sshll.u32 %s1257, 4
          %1259 = vsyncadd %s1245, %s1258
          %p1260 = scmp.ne.s32.totalorder 0, %s1256
          %s1261 = smul.addr %s1252, 4
          %s1262 = scalar_lea.hbm %s9, %s1261
          %s1263 = smul.u32 4, %s1255
          %s1264 = sshll.u32 %s1248, 4
          %s1265 = int_to_ptr.vmem [resolvable:$true] %s1264
          %s1266 = sshll.u32 %s1262, 4
          %s1267 = int_to_ptr.hbm [resolvable:$true] %s1266
          %s1268 = sshll.u32 %s1263, 4
          %1272 = dma.vmem_to_hbm [thread:$0]  (%p1260), %s1265, %s1268, %s1267, %s1245, 64, 64, 4
        $region60: #{tpu_custom_call.1} parent=55 // pred_fallthru
          _
      $region56: #{tpu_custom_call.1} parent=5 // pred_fallthru
        _
      %p1273 = scmp.le.s32.totalorder 2, %s18
      // Predicated region
      $region61: #{tpu_custom_call.1} parent=5 // pred_check
        %p1274 = pneg %p1273
      $region62: #{tpu_custom_call.1} parent=5 // pred_check_branch
        %1276 = sbr.rel (%p1274) target = $region64
      $region63: #{tpu_custom_call.1} parent=5 // pred_region
        %s1277 = ssub.s32 %s18, 2
        // Predicated region
        $region65: #{tpu_custom_call.1} parent=63 // pred_check
          %p1278 = pneg %p241
        $region66: #{tpu_custom_call.1} parent=63 // pred_check_branch
          %1280 = sbr.rel (%p1278) target = $region68
        $region67: #{tpu_custom_call.1} parent=63 // pred_region
          %s1281 = sand.u32 %s226, 1
          %s1282 = scalar_lea.sflag [#allocation3], %s1281
          %s1283 = sand.u32 %s226, 1
          %s1284 = smul.addr %s1283, 128
          %s1285 = scalar_lea.vmem [#allocation2], %s1284
          %1287 = dma.done %s1282, 2048
        $region68: #{tpu_custom_call.1} parent=63 // pred_fallthru
          _
      $region64: #{tpu_custom_call.1} parent=5 // pred_fallthru
        _
    $region6: #{tpu_custom_call.1} parent=1 // loop_footer
      %s22 = sadd.s32 1, %s18
    $region7: #{tpu_custom_call.1} parent=1 // loop_footer_branch
      %17 = sbr.rel target = $region3
    $region8: #{tpu_custom_call.1} parent=1 // loop_exit
      _
    %1288 = vsyncpa [#allocation3], 1
    %s1289 = scalar_lea.sflag [#allocation3], 1
    %1290 = vsyncpa %s1289, 1

</llo_original>
